<compile_context>
chip_gen: v7x
topology: tpu7x:2x2x1
jax: 0.10.0
libtpu: 0.0.40
codegen_flags: <defaults>
</compile_context>

<pallas_src>
import math
from functools import partial

import jax
import jax.numpy as jnp
from jax import lax
from jax.experimental import pallas as pl
from jax.experimental.pallas import tpu as pltpu

VMEM_LIMIT_BYTES = 48 * 1024 * 1024   # <= v7x 64 MiB physical, <= v5e/v6e 128 MiB


# ----------------------------- in-kernel helpers -----------------------------

def _layer_norm(x, scale, shift, eps=1e-5):
    # x: (rows, E) f32, scale/shift: (1, E) f32. Matches torch var(unbiased=False).
    mean = jnp.mean(x, axis=-1, keepdims=True)
    var = jnp.mean((x - mean) ** 2, axis=-1, keepdims=True)
    return scale * ((x - mean) / jnp.sqrt(var + eps)) + shift


def _gelu(x):
    c = math.sqrt(2.0 / math.pi)
    return 0.5 * x * (1.0 + jnp.tanh(c * (x + 0.044715 * x * x * x)))


# ------------------------------- Pallas kernels ------------------------------

def attn_block_kernel(x_ref, ln1s_ref, ln1b_ref, wqkv_ref, wo_ref, bo_ref,
                      out_ref, *, num_heads):
    x = x_ref[0]                                   # (S, E) f32 residual input
    S, E = x.shape
    Dh = E // num_heads
    inv_sqrt = 1.0 / math.sqrt(Dh)

    # pre-LN + fused QKV projection (bf16 operands, f32 accumulation)
    xn = _layer_norm(x, ln1s_ref[...], ln1b_ref[...])
    qkv = jnp.dot(xn.astype(jnp.bfloat16), wqkv_ref[...],
                  preferred_element_type=jnp.float32)          # (S, 3E) f32

    q = qkv[:, 0 * E:1 * E] * inv_sqrt     # fold 1/sqrt(Dh) into q (one (S,E) mul)
    k = qkv[:, 1 * E:2 * E]
    v = qkv[:, 2 * E:3 * E]

    # head-major (H, S, Dh) bf16 operands for batched MXU matmuls
    qh = jnp.swapaxes(q.reshape(S, num_heads, Dh), 0, 1).astype(jnp.bfloat16)
    kh = jnp.swapaxes(k.reshape(S, num_heads, Dh), 0, 1).astype(jnp.bfloat16)
    vh = jnp.swapaxes(v.reshape(S, num_heads, Dh), 0, 1).astype(jnp.bfloat16)

    # scores[h, i, j] = sum_d qh[h,i,d] * kh[h,j,d]   -> (H, S, S), f32 acc
    s = lax.dot_general(qh, kh, (((2,), (2,)), ((0,), (0,))),
                        preferred_element_type=jnp.float32)

    # causal mask built in-kernel (additive large-negative bias where col > row)
    row = lax.broadcasted_iota(jnp.int32, (S, S), 0)
    col = lax.broadcasted_iota(jnp.int32, (S, S), 1)
    s = s + jnp.where(col > row, -1e30, 0.0).astype(jnp.float32)[None, :, :]

    # softmax: stats in f32; divide moved to the EUP via approx reciprocal
    m = jnp.max(s, axis=-1, keepdims=True)
    e = jnp.exp(s - m)
    p = e * pl.reciprocal(jnp.sum(e, axis=-1, keepdims=True), approx=True)

    # ctx[h, i, d] = sum_j p[h,i,j] * vh[h,j,d]       -> (H, S, Dh)
    ctx_h = lax.dot_general(p.astype(jnp.bfloat16), vh,
                            (((2,), (1,)), ((0,), (0,))),
                            preferred_element_type=jnp.float32)
    ctx = jnp.swapaxes(ctx_h, 0, 1).reshape(S, E)                 # (S, E)

    attn = jnp.dot(ctx.astype(jnp.bfloat16), wo_ref[...],
                   preferred_element_type=jnp.float32) + bo_ref[...]
    out_ref[0] = x + attn                                         # residual 1
    # TODO(synk): at real GPT-2 scale (S=1024) switch to flash-style online
    # softmax over KV tiles with a VMEM accumulator instead of the (H,S,S) scores.


def ffn_block_kernel(x_ref, ln2s_ref, ln2b_ref, w1_ref, b1_ref, w2_ref, b2_ref,
                     out_ref):
    x = x_ref[0]                                                  # (tq, E) f32
    xn = _layer_norm(x, ln2s_ref[...], ln2b_ref[...])
    h = jnp.dot(xn.astype(jnp.bfloat16), w1_ref[...],
                preferred_element_type=jnp.float32) + b1_ref[...]
    h = _gelu(h)                                                  # f32 VPU/EUP
    ff = jnp.dot(h.astype(jnp.bfloat16), w2_ref[...],
                 preferred_element_type=jnp.float32) + b2_ref[...]
    out_ref[0] = x + ff                                           # residual 2
    # TODO(synk): at E=768 also tile W1/W2 over the 4E dim with a K-reduction
    # grid axis ("arbitrary") + f32 VMEM accumulator to bound weight-slab VMEM.


def head_kernel(x_ref, ls_ref, lb_ref, w_ref, out_ref):
    x = x_ref[0]                                                  # (S, E)
    xn = _layer_norm(x, ls_ref[...], lb_ref[...])
    out_ref[0] = jnp.dot(xn.astype(jnp.bfloat16), w_ref[...],
                         preferred_element_type=jnp.float32)      # (S, tv)


# ------------------------------ pallas_call glue ------------------------------

def _pick_tile(n, pref):
    # use the preferred tile if it evenly divides n, otherwise fall back to n
    return pref if (n > pref and n % pref == 0) else n


def attention_block(x, blk, num_heads):
    B, S, E = x.shape
    vec_e = pl.BlockSpec((1, E), lambda b: (0, 0))
    return pl.pallas_call(
        partial(attn_block_kernel, num_heads=num_heads),
        out_shape=jax.ShapeDtypeStruct((B, S, E), jnp.float32),
        grid=(B,),
        in_specs=[
            pl.BlockSpec((1, S, E), lambda b: (b, 0, 0)),        # x
            vec_e, vec_e,                                        # ln1 scale/shift
            pl.BlockSpec((E, 3 * E), lambda b: (0, 0)),          # fused Wqkv (bf16)
            pl.BlockSpec((E, E), lambda b: (0, 0)),              # Wo (bf16)
            vec_e,                                               # bo
        ],
        out_specs=pl.BlockSpec((1, S, E), lambda b: (b, 0, 0)),
        compiler_params=pltpu.CompilerParams(
            dimension_semantics=("parallel",),
            vmem_limit_bytes=VMEM_LIMIT_BYTES),
    )(x, blk['ln1_scale'][None, :], blk['ln1_shift'][None, :],
      blk['wqkv'], blk['wo'], blk['bo'][None, :])


def ffn_block(x, blk):
    B, S, E = x.shape
    H4 = blk['w1'].shape[1]
    tq = _pick_tile(S, 256)                   # row tile over the sequence dim
    vec_e = pl.BlockSpec((1, E), lambda b, s: (0, 0))
    vec_h = pl.BlockSpec((1, H4), lambda b, s: (0, 0))
    return pl.pallas_call(
        ffn_block_kernel,
        out_shape=jax.ShapeDtypeStruct((B, S, E), jnp.float32),
        grid=(B, S // tq),
        in_specs=[
            pl.BlockSpec((1, tq, E), lambda b, s: (b, s, 0)),    # x row tile
            vec_e, vec_e,                                        # ln2 scale/shift
            pl.BlockSpec((E, H4), lambda b, s: (0, 0)),          # W1 (bf16)
            vec_h,                                               # b1
            pl.BlockSpec((H4, E), lambda b, s: (0, 0)),          # W2 (bf16)
            vec_e,                                               # b2
        ],
        out_specs=pl.BlockSpec((1, tq, E), lambda b, s: (b, s, 0)),
        compiler_params=pltpu.CompilerParams(
            dimension_semantics=("parallel", "parallel"),
            vmem_limit_bytes=VMEM_LIMIT_BYTES),
    )(x, blk['ln2_scale'][None, :], blk['ln2_shift'][None, :],
      blk['w1'], blk['b1'][None, :], blk['w2'], blk['b2'][None, :])


def final_head(x, scale, shift, w_out):
    B, S, E = x.shape
    V = w_out.shape[1]
    tv = _pick_tile(V, 2048)                  # vocab tile (lane-dense at scale)
    return pl.pallas_call(
        head_kernel,
        out_shape=jax.ShapeDtypeStruct((B, S, V), jnp.float32),
        grid=(B, V // tv),
        in_specs=[
            pl.BlockSpec((1, S, E), lambda b, v: (b, 0, 0)),
            pl.BlockSpec((1, E), lambda b, v: (0, 0)),
            pl.BlockSpec((1, E), lambda b, v: (0, 0)),
            pl.BlockSpec((E, tv), lambda b, v: (0, v)),          # W_out tile (bf16)
        ],
        out_specs=pl.BlockSpec((1, S, tv), lambda b, v: (b, 0, v)),
        compiler_params=pltpu.CompilerParams(
            dimension_semantics=("parallel", "parallel"),
            vmem_limit_bytes=VMEM_LIMIT_BYTES),
    )(x, scale[None, :], shift[None, :], w_out)


def gpt2_forward(in_idx, params, num_heads):
    B, S = in_idx.shape
    # Embedding lookups (gather) + add are plain-JAX glue (not the hot path).
    tok = jnp.take(params['tok_emb'], in_idx, axis=0)        # (B, S, E)
    pos = params['pos_emb'][:S][None, :, :]                  # (1, S, E)
    x = (tok + pos).astype(jnp.float32)
    # dropout(p) at inference: identity.
    for blk in params['blocks']:
        x = attention_block(x, blk, num_heads)
        x = ffn_block(x, blk)
    return final_head(x, params['final_ln_scale'],
                      params['final_ln_shift'], params['w_out'])


# ------------------------------- parameter init -------------------------------

def init_params(key, vocab, embed, ctx, layers):
    def norm(k, shape, scale=0.02):
        return (scale * jax.random.normal(k, shape)).astype(jnp.float32)

    keys = jax.random.split(key, 3 + layers)
    params = {
        'tok_emb': norm(keys[0], (vocab, embed)),
        'pos_emb': norm(keys[1], (ctx, embed)),
        'final_ln_scale': jnp.ones((embed,), jnp.float32),
        'final_ln_shift': jnp.zeros((embed,), jnp.float32),
        'w_out': norm(keys[2], (embed, vocab)).astype(jnp.bfloat16),
        'blocks': [],
    }
    for i in range(layers):
        bk = jax.random.split(keys[3 + i], 8)
        wq = norm(bk[0], (embed, embed))
        wk = norm(bk[1], (embed, embed))
        wv = norm(bk[2], (embed, embed))
        params['blocks'].append(dict(
            ln1_scale=jnp.ones((embed,), jnp.float32),
            ln1_shift=jnp.zeros((embed,), jnp.float32),
            # fused QKV, pre-transposed [in, out], bf16 MXU operands
            wqkv=jnp.concatenate([wq, wk, wv], axis=1).astype(jnp.bfloat16),
            wo=norm(bk[3], (embed, embed)).astype(jnp.bfloat16),
            bo=norm(bk[4], (embed,)),
            ln2_scale=jnp.ones((embed,), jnp.float32),
            ln2_shift=jnp.zeros((embed,), jnp.float32),
            w1=norm(bk[5], (embed, 4 * embed)).astype(jnp.bfloat16),
            b1=norm(bk[6], (4 * embed,)),
            w2=norm(bk[7], (4 * embed, embed)).astype(jnp.bfloat16),
            b2=jnp.zeros((embed,), jnp.float32),
        ))
    return params


if __name__ == "__main__":
    VOCAB, EMBED, CTX, LAYERS, HEADS = 64, 32, 8, 2, 4
    B, S = 2, 8

    key = jax.random.PRNGKey(0)
    kp, ki = jax.random.split(key)
    params = init_params(kp, VOCAB, EMBED, CTX, LAYERS)
    in_idx = jax.random.randint(ki, (B, S), 0, VOCAB, dtype=jnp.int32)

    logits = gpt2_forward(in_idx, params, HEADS)
    logits = jax.block_until_ready(logits)
    assert logits.shape == (B, S, VOCAB)
    assert bool(jnp.all(jnp.isfinite(logits)))
    print("KERNEL_OK")
</pallas_src>

<mosaic_0001>
module attributes {stable_mosaic.version = 11 : i64} {
  func.func @attn_block_kernel(%arg0: i32, %arg1: memref<1x8x32xf32, #tpu.memory_space<vmem>>, %arg2: memref<1x32xf32, #tpu.memory_space<vmem>>, %arg3: memref<1x32xf32, #tpu.memory_space<vmem>>, %arg4: memref<32x96xbf16, #tpu.memory_space<vmem>>, %arg5: memref<32x32xbf16, #tpu.memory_space<vmem>>, %arg6: memref<1x32xf32, #tpu.memory_space<vmem>>, %arg7: memref<1x8x32xf32, #tpu.memory_space<vmem>>) attributes {dimension_semantics = [#tpu.dimension_semantics<parallel>], iteration_bounds = array<i64: 2>, scalar_prefetch = 0 : i64, scratch_operands = 0 : i64, tpu.core_type = #tpu.core_type<tc>, window_params = [{transform_indices = @transform_0, window_bounds = array<i64: 1, 8, 32>}, {pipeline_mode = #tpu.pipeline_mode<synchronous>, transform_indices = @transform_1, window_bounds = array<i64: 1, 32>}, {pipeline_mode = #tpu.pipeline_mode<synchronous>, transform_indices = @transform_2, window_bounds = array<i64: 1, 32>}, {pipeline_mode = #tpu.pipeline_mode<synchronous>, transform_indices = @transform_3, window_bounds = array<i64: 32, 96>}, {pipeline_mode = #tpu.pipeline_mode<synchronous>, transform_indices = @transform_4, window_bounds = array<i64: 32, 32>}, {pipeline_mode = #tpu.pipeline_mode<synchronous>, transform_indices = @transform_5, window_bounds = array<i64: 1, 32>}, {transform_indices = @transform_6, window_bounds = array<i64: 1, 8, 32>}]} {
    %c0 = arith.constant 0 : index
    %c0_0 = arith.constant 0 : index
    %c0_1 = arith.constant 0 : index
    %0 = vector.load %arg1[%c0, %c0_0, %c0_1] : memref<1x8x32xf32, #tpu.memory_space<vmem>>, vector<1x8x32xf32>
    %1 = vector.shape_cast %0 : vector<1x8x32xf32> to vector<8x32xf32>
    %c0_2 = arith.constant 0 : index
    %c0_3 = arith.constant 0 : index
    %2 = vector.load %arg2[%c0_2, %c0_3] : memref<1x32xf32, #tpu.memory_space<vmem>>, vector<1x32xf32>
    %c0_4 = arith.constant 0 : index
    %c0_5 = arith.constant 0 : index
    %3 = vector.load %arg3[%c0_4, %c0_5] : memref<1x32xf32, #tpu.memory_space<vmem>>, vector<1x32xf32>
    %cst = arith.constant dense<0.000000e+00> : vector<8xf32>
    %4 = vector.multi_reduction <add>, %1, %cst [1] : vector<8x32xf32> to vector<8xf32>
    %5 = vector.shape_cast %4 : vector<8xf32> to vector<8x1xf32>
    %cst_6 = arith.constant 3.200000e+01 : f32
    %6 = vector.broadcast %cst_6 : f32 to vector<8x1xf32>
    %7 = arith.divf %5, %6 : vector<8x1xf32>
    %8 = vector.broadcast %7 : vector<8x1xf32> to vector<8x32xf32>
    %9 = arith.subf %1, %8 : vector<8x32xf32>
    %10 = arith.mulf %9, %9 : vector<8x32xf32>
    %cst_7 = arith.constant dense<0.000000e+00> : vector<8xf32>
    %11 = vector.multi_reduction <add>, %10, %cst_7 [1] : vector<8x32xf32> to vector<8xf32>
    %12 = vector.shape_cast %11 : vector<8xf32> to vector<8x1xf32>
    %cst_8 = arith.constant 3.200000e+01 : f32
    %13 = vector.broadcast %cst_8 : f32 to vector<8x1xf32>
    %14 = arith.divf %12, %13 : vector<8x1xf32>
    %15 = vector.broadcast %7 : vector<8x1xf32> to vector<8x32xf32>
    %16 = arith.subf %1, %15 : vector<8x32xf32>
    %cst_9 = arith.constant 9.99999974E-6 : f32
    %17 = vector.broadcast %cst_9 : f32 to vector<8x1xf32>
    %18 = arith.addf %14, %17 : vector<8x1xf32>
    %19 = math.sqrt %18 : vector<8x1xf32>
    %20 = vector.broadcast %19 : vector<8x1xf32> to vector<8x32xf32>
    %21 = arith.divf %16, %20 : vector<8x32xf32>
    %22 = vector.broadcast %2 : vector<1x32xf32> to vector<8x32xf32>
    %23 = arith.mulf %22, %21 : vector<8x32xf32>
    %24 = vector.broadcast %3 : vector<1x32xf32> to vector<8x32xf32>
    %25 = arith.addf %23, %24 : vector<8x32xf32>
    %26 = arith.truncf %25 : vector<8x32xf32> to vector<8x32xbf16>
    %c0_10 = arith.constant 0 : index
    %c0_11 = arith.constant 0 : index
    %27 = vector.load %arg4[%c0_10, %c0_11] : memref<32x96xbf16, #tpu.memory_space<vmem>>, vector<32x96xbf16>
    %cst_12 = arith.constant dense<0.000000e+00> : vector<8x96xf32>
    %28 = tpu.matmul %26, %27, %cst_12 {dimension_numbers = #tpu.dot_dimension_numbers<[1], [0], [0], [1], [0, 0, 1, 1], [], []>} : vector<8x32xbf16>, vector<32x96xbf16>, vector<8x96xf32> -> vector<8x96xf32>
    %29 = vector.extract_strided_slice %28 {offsets = [0, 0], sizes = [8, 32], strides = [1, 1]} : vector<8x96xf32> to vector<8x32xf32>
    %cst_13 = arith.constant 0.353553385 : f32
    %30 = vector.broadcast %cst_13 : f32 to vector<8x32xf32>
    %31 = arith.mulf %29, %30 : vector<8x32xf32>
    %32 = vector.extract_strided_slice %28 {offsets = [0, 32], sizes = [8, 32], strides = [1, 1]} : vector<8x96xf32> to vector<8x32xf32>
    %33 = vector.extract_strided_slice %28 {offsets = [0, 64], sizes = [8, 32], strides = [1, 1]} : vector<8x96xf32> to vector<8x32xf32>
    %34 = vector.shape_cast %31 : vector<8x32xf32> to vector<8x4x8xf32>
    %35 = tpu.transpose %34, [1, 0, 2] : vector<8x4x8xf32> -> vector<4x8x8xf32>
    %36 = arith.truncf %35 : vector<4x8x8xf32> to vector<4x8x8xbf16>
    %37 = vector.shape_cast %32 : vector<8x32xf32> to vector<8x4x8xf32>
    %38 = tpu.transpose %37, [1, 0, 2] : vector<8x4x8xf32> -> vector<4x8x8xf32>
    %39 = arith.truncf %38 : vector<4x8x8xf32> to vector<4x8x8xbf16>
    %40 = vector.shape_cast %33 : vector<8x32xf32> to vector<8x4x8xf32>
    %41 = tpu.transpose %40, [1, 0, 2] : vector<8x4x8xf32> -> vector<4x8x8xf32>
    %42 = arith.truncf %41 : vector<4x8x8xf32> to vector<4x8x8xbf16>
    %cst_14 = arith.constant dense<0.000000e+00> : vector<4x8x8xf32>
    %43 = tpu.matmul %36, %39, %cst_14 {dimension_numbers = #tpu.dot_dimension_numbers<[2], [2], [1], [1], [0, 0, 0, 1, 1, 1], [0], [0]>} : vector<4x8x8xbf16>, vector<4x8x8xbf16>, vector<4x8x8xf32> -> vector<4x8x8xf32>
    %44 = tpu.iota {dimensions = array<i32: 0>} : vector<8x8xi32>
    %45 = tpu.iota {dimensions = array<i32: 1>} : vector<8x8xi32>
    %46 = arith.cmpi sgt, %45, %44 : vector<8x8xi32>
    %cst_15 = arith.constant -1.000000e+30 : f32
    %cst_16 = arith.constant 0.000000e+00 : f32
    %47 = vector.broadcast %cst_15 : f32 to vector<8x8xf32>
    %48 = vector.broadcast %cst_16 : f32 to vector<8x8xf32>
    %49 = arith.select %46, %47, %48 : vector<8x8xi1>, vector<8x8xf32>
    %50 = vector.shape_cast %49 : vector<8x8xf32> to vector<1x8x8xf32>
    %51 = vector.broadcast %50 : vector<1x8x8xf32> to vector<4x8x8xf32>
    %52 = arith.addf %43, %51 : vector<4x8x8xf32>
    %cst_17 = arith.constant dense<0xFF800000> : vector<4x8xf32>
    %53 = vector.multi_reduction <maximumf>, %52, %cst_17 [2] : vector<4x8x8xf32> to vector<4x8xf32>
    %54 = vector.shape_cast %53 : vector<4x8xf32> to vector<4x8x1xf32>
    %55 = vector.broadcast %54 : vector<4x8x1xf32> to vector<4x8x8xf32>
    %56 = arith.subf %52, %55 : vector<4x8x8xf32>
    %57 = math.exp %56 : vector<4x8x8xf32>
    %cst_18 = arith.constant dense<0.000000e+00> : vector<4x8xf32>
    %58 = vector.multi_reduction <add>, %57, %cst_18 [2] : vector<4x8x8xf32> to vector<4x8xf32>
    %59 = vector.shape_cast %58 : vector<4x8xf32> to vector<4x8x1xf32>
    %60 = tpu.reciprocal %59 {approx = true} : vector<4x8x1xf32> -> vector<4x8x1xf32>
    %61 = vector.broadcast %60 : vector<4x8x1xf32> to vector<4x8x8xf32>
    %62 = arith.mulf %57, %61 : vector<4x8x8xf32>
    %63 = arith.truncf %62 : vector<4x8x8xf32> to vector<4x8x8xbf16>
    %cst_19 = arith.constant dense<0.000000e+00> : vector<4x8x8xf32>
    %64 = tpu.matmul %63, %42, %cst_19 {dimension_numbers = #tpu.dot_dimension_numbers<[2], [1], [1], [2], [0, 0, 0, 1, 1, 2], [0], [0]>} : vector<4x8x8xbf16>, vector<4x8x8xbf16>, vector<4x8x8xf32> -> vector<4x8x8xf32>
    %65 = tpu.transpose %64, [1, 0, 2] : vector<4x8x8xf32> -> vector<8x4x8xf32>
    %66 = vector.shape_cast %65 : vector<8x4x8xf32> to vector<8x32xf32>
    %67 = arith.truncf %66 : vector<8x32xf32> to vector<8x32xbf16>
    %c0_20 = arith.constant 0 : index
    %c0_21 = arith.constant 0 : index
    %68 = vector.load %arg5[%c0_20, %c0_21] : memref<32x32xbf16, #tpu.memory_space<vmem>>, vector<32x32xbf16>
    %cst_22 = arith.constant dense<0.000000e+00> : vector<8x32xf32>
    %69 = tpu.matmul %67, %68, %cst_22 {dimension_numbers = #tpu.dot_dimension_numbers<[1], [0], [0], [1], [0, 0, 1, 1], [], []>} : vector<8x32xbf16>, vector<32x32xbf16>, vector<8x32xf32> -> vector<8x32xf32>
    %c0_23 = arith.constant 0 : index
    %c0_24 = arith.constant 0 : index
    %70 = vector.load %arg6[%c0_23, %c0_24] : memref<1x32xf32, #tpu.memory_space<vmem>>, vector<1x32xf32>
    %71 = vector.broadcast %70 : vector<1x32xf32> to vector<8x32xf32>
    %72 = arith.addf %69, %71 : vector<8x32xf32>
    %73 = arith.addf %1, %72 : vector<8x32xf32>
    %c0_25 = arith.constant 0 : index
    %c0_26 = arith.constant 0 : index
    %c0_27 = arith.constant 0 : index
    %74 = vector.load %arg7[%c0_25, %c0_26, %c0_27] : memref<1x8x32xf32, #tpu.memory_space<vmem>>, vector<1x8x32xf32>
    %75 = vector.shape_cast %74 : vector<1x8x32xf32> to vector<8x32xf32>
    %76 = vector.shape_cast %73 : vector<8x32xf32> to vector<1x8x32xf32>
    tpu.vector_store %arg7[%c0_25, %c0_26, %c0_27], %76 {strides = array<i32>} : memref<1x8x32xf32, #tpu.memory_space<vmem>>, vector<1x8x32xf32>,
    return
  }
  func.func @transform_0(%arg0: i32) -> (i32, i32, i32) {
    %c0_i32 = arith.constant 0 : i32
    %c0_i32_0 = arith.constant 0 : i32
    %c0_i32_1 = arith.constant 0 : i32
    return %arg0, %c0_i32, %c0_i32_0 : i32, i32, i32
  }
  func.func @transform_1(%arg0: i32) -> (i32, i32) {
    %c0_i32 = arith.constant 0 : i32
    %c0_i32_0 = arith.constant 0 : i32
    %c0_i32_1 = arith.constant 0 : i32
    return %c0_i32, %c0_i32_0 : i32, i32
  }
  func.func @transform_2(%arg0: i32) -> (i32, i32) {
    %c0_i32 = arith.constant 0 : i32
    %c0_i32_0 = arith.constant 0 : i32
    %c0_i32_1 = arith.constant 0 : i32
    return %c0_i32, %c0_i32_0 : i32, i32
  }
  func.func @transform_3(%arg0: i32) -> (i32, i32) {
    %c0_i32 = arith.constant 0 : i32
    %c0_i32_0 = arith.constant 0 : i32
    %c0_i32_1 = arith.constant 0 : i32
    return %c0_i32, %c0_i32_0 : i32, i32
  }
  func.func @transform_4(%arg0: i32) -> (i32, i32) {
    %c0_i32 = arith.constant 0 : i32
    %c0_i32_0 = arith.constant 0 : i32
    %c0_i32_1 = arith.constant 0 : i32
    return %c0_i32, %c0_i32_0 : i32, i32
  }
  func.func @transform_5(%arg0: i32) -> (i32, i32) {
    %c0_i32 = arith.constant 0 : i32
    %c0_i32_0 = arith.constant 0 : i32
    %c0_i32_1 = arith.constant 0 : i32
    return %c0_i32, %c0_i32_0 : i32, i32
  }
  func.func @transform_6(%arg0: i32) -> (i32, i32, i32) {
    %c0_i32 = arith.constant 0 : i32
    %c0_i32_0 = arith.constant 0 : i32
    %c0_i32_1 = arith.constant 0 : i32
    return %arg0, %c0_i32, %c0_i32_0 : i32, i32, i32
  }
}

</mosaic_0001>

<llo_original>
// kernel: tpu_custom_call.1
$region0: #{tpu_custom_call.1}
  #allocation0 [shape = 'u32[]', space=smem, size = 0x4, offset = 0x4, fixed_abs, tag = 'smem constant byte address 0x4 - core index']
  #allocation1 [shape = 'u32[144,128]{1,0:T(1,128)}', space=vmem, size = 0x12000, scoped, tag = 'internal scratch']
  %s0 = inlined_call_operand.hbm [shape: f32[2,8,32], index: 0, kind: input, shape index: {}]
  %s1 = inlined_call_operand.vmem [shape: f32[1,32], index: 1, kind: input, shape index: {}]
  %s2 = inlined_call_operand.vmem [shape: f32[1,32], index: 2, kind: input, shape index: {}]
  %s3 = inlined_call_operand.hbm [shape: bf16[32,96], index: 3, kind: input, shape index: {}]
  %s4 = inlined_call_operand.hbm [shape: bf16[32,32], index: 4, kind: input, shape index: {}]
  %s5 = inlined_call_operand.vmem [shape: f32[1,32], index: 5, kind: input, shape index: {}]
  %s6 = inlined_call_operand.hbm [shape: f32[2,8,32], index: 6, kind: output, shape index: {}]
  %s7 = sld [smem:[#allocation0]]
  $region69: #{tpu_custom_call.1} parent=0
    _
  %s9 = ssub.s32 1, %s7
  %s10 = scalar_select 0, %s9, %s7
  $region1: #{tpu_custom_call.1} parent=0
    #allocation2 [shape = 'u8[8192]{0}', space=vmem, size = 0x2000, scoped, tag = 'input window, operand 0']
    #allocation3 [shape = 's32[2]{0}', space=sflag, size = 0x8, scoped, tag = 'scoped memory for tpu_custom_call.1']
    #allocation4 [shape = 's32[2]{0}', space=sflag, size = 0x8, scoped, tag = 'scoped memory for tpu_custom_call.1']
    #allocation5 [shape = 'u8[8192]{0}', space=vmem, size = 0x2000, scoped, tag = 'input window, operand 3, single buffered']
    #allocation6 [shape = 's32[1]{0}', space=sflag, size = 0x4, scoped, tag = 'scoped memory for tpu_custom_call.1']
    #allocation7 [shape = 'u8[8192]{0}', space=vmem, size = 0x2000, scoped, tag = 'input window, operand 4, single buffered']
    #allocation8 [shape = 'u8[8192]{0}', space=vmem, size = 0x2000, scoped, tag = 'output window, operand 0']
    %11 = vsyncpa [#allocation3], 0
    %s12 = scalar_lea.sflag [#allocation3], 1
    %13 = vsyncpa %s12, 0
    %14 = vsyncpa [#allocation6], 0
    %15 = vsyncpa [#allocation4], 0
    %s16 = scalar_lea.sflag [#allocation4], 1
    %17 = vsyncpa %s16, 0
    loop: start=0, step=1, limit=4
    $region2: #{tpu_custom_call.1} parent=1 // loop_pre_header
      _
    $region3: #{tpu_custom_call.1} parent=1 // loop_header
      %s19 = sphi 0, %s23
      %p20 = scmp.ge.s32.totalorder %s19, 4
      %s29 = sphi 0, %s31
      %s32 = sphi 0, %s29
      %s33 = sphi 0, %s32
      %s49 = sphi 0, %s33
      %s53 = sphi 0, %s53
      %s55 = sphi 0, %s53
      %s56 = sphi 0, %s55
      %s70 = sphi 0, %s56
      %s74 = sphi 0, %s74
      %s76 = sphi 0, %s74
      %s77 = sphi 0, %s76
      %s91 = sphi 0, %s77
      %s95 = sphi 0, %s95
      %s97 = sphi 0, %s95
      %s98 = sphi 0, %s97
      %s112 = sphi 0, %s98
      %s116 = sphi 0, %s116
      %s118 = sphi 0, %s116
      %s119 = sphi 0, %s118
      %s133 = sphi 0, %s119
      %s137 = sphi 0, %s137
      %s139 = sphi 0, %s137
      %s140 = sphi 0, %s139
      %s154 = sphi 0, %s140
      %s160 = sphi 0, %s162
      %s163 = sphi 0, %s160
      %s164 = sphi 0, %s163
      %s180 = sphi 0, %s164
    $region4: #{tpu_custom_call.1} parent=1 // loop_header_branch
      %22 = sbr.rel (%p20) target = $region8
    $region5: #{tpu_custom_call.1} parent=1 // loop_body
      %s24 = ssub.s32 %s19, 1
      %s25 = ssub.s32 %s19, 2
      %s26 = sadd.s32 %s19, 1
      %s27 = ssub.s32 %s19, %s26
      %p28 = scmp.eq.s32.totalorder %s27, 0
      %s30 = sadd.s32 %s29, 1
      %s31 = scalar_select %p28, %s29, %s30
      %p34 = pneg %p28
      %p35 = scmp.eq.s32.totalorder %s19, 1
      %p36 = por %p34, %p35
      %p37 = scmp.ne.s32.totalorder %s29, %s32
      %p38 = scmp.eq.s32.totalorder %s19, 0
      %p39 = por %p37, %p38
      %p40 = scmp.ne.s32.totalorder %s29, %s32
      %p41 = scmp.eq.s32.totalorder %s24, 1
      %p42 = por %p40, %p41
      %p43 = scmp.ne.s32.totalorder %s32, %s33
      %p44 = scmp.eq.s32.totalorder %s24, 0
      %p45 = por %p43, %p44
      %p46 = scmp.ne.s32.totalorder %s32, %s33
      %p47 = scmp.eq.s32.totalorder %s25, 1
      %p48 = por %p46, %p47
      %p50 = scmp.ne.s32.totalorder %s33, %s49
      %p51 = scmp.eq.s32.totalorder %s25, 0
      %p52 = por %p50, %p51
      %s54 = sadd.s32 %s53, 1
      %p57 = scmp.eq.s32.totalorder %s19, 1
      %p58 = scmp.ne.s32.totalorder %s53, %s55
      %p59 = scmp.eq.s32.totalorder %s19, 0
      %p60 = por %p58, %p59
      %p61 = scmp.ne.s32.totalorder %s53, %s55
      %p62 = scmp.eq.s32.totalorder %s24, 1
      %p63 = por %p61, %p62
      %p64 = scmp.ne.s32.totalorder %s55, %s56
      %p65 = scmp.eq.s32.totalorder %s24, 0
      %p66 = por %p64, %p65
      %p67 = scmp.ne.s32.totalorder %s55, %s56
      %p68 = scmp.eq.s32.totalorder %s25, 1
      %p69 = por %p67, %p68
      %p71 = scmp.ne.s32.totalorder %s56, %s70
      %p72 = scmp.eq.s32.totalorder %s25, 0
      %p73 = por %p71, %p72
      %s75 = sadd.s32 %s74, 1
      %p78 = scmp.eq.s32.totalorder %s19, 1
      %p79 = scmp.ne.s32.totalorder %s74, %s76
      %p80 = scmp.eq.s32.totalorder %s19, 0
      %p81 = por %p79, %p80
      %p82 = scmp.ne.s32.totalorder %s74, %s76
      %p83 = scmp.eq.s32.totalorder %s24, 1
      %p84 = por %p82, %p83
      %p85 = scmp.ne.s32.totalorder %s76, %s77
      %p86 = scmp.eq.s32.totalorder %s24, 0
      %p87 = por %p85, %p86
      %p88 = scmp.ne.s32.totalorder %s76, %s77
      %p89 = scmp.eq.s32.totalorder %s25, 1
      %p90 = por %p88, %p89
      %p92 = scmp.ne.s32.totalorder %s77, %s91
      %p93 = scmp.eq.s32.totalorder %s25, 0
      %p94 = por %p92, %p93
      %s96 = sadd.s32 %s95, 1
      %p99 = scmp.eq.s32.totalorder %s19, 1
      %p100 = scmp.ne.s32.totalorder %s95, %s97
      %p101 = scmp.eq.s32.totalorder %s19, 0
      %p102 = por %p100, %p101
      %p103 = scmp.ne.s32.totalorder %s95, %s97
      %p104 = scmp.eq.s32.totalorder %s24, 1
      %p105 = por %p103, %p104
      %p106 = scmp.ne.s32.totalorder %s97, %s98
      %p107 = scmp.eq.s32.totalorder %s24, 0
      %p108 = por %p106, %p107
      %p109 = scmp.ne.s32.totalorder %s97, %s98
      %p110 = scmp.eq.s32.totalorder %s25, 1
      %p111 = por %p109, %p110
      %p113 = scmp.ne.s32.totalorder %s98, %s112
      %p114 = scmp.eq.s32.totalorder %s25, 0
      %p115 = por %p113, %p114
      %s117 = sadd.s32 %s116, 1
      %p120 = scmp.eq.s32.totalorder %s19, 1
      %p121 = scmp.ne.s32.totalorder %s116, %s118
      %p122 = scmp.eq.s32.totalorder %s19, 0
      %p123 = por %p121, %p122
      %p124 = scmp.ne.s32.totalorder %s116, %s118
      %p125 = scmp.eq.s32.totalorder %s24, 1
      %p126 = por %p124, %p125
      %p127 = scmp.ne.s32.totalorder %s118, %s119
      %p128 = scmp.eq.s32.totalorder %s24, 0
      %p129 = por %p127, %p128
      %p130 = scmp.ne.s32.totalorder %s118, %s119
      %p131 = scmp.eq.s32.totalorder %s25, 1
      %p132 = por %p130, %p131
      %p134 = scmp.ne.s32.totalorder %s119, %s133
      %p135 = scmp.eq.s32.totalorder %s25, 0
      %p136 = por %p134, %p135
      %s138 = sadd.s32 %s137, 1
      %p141 = scmp.eq.s32.totalorder %s19, 1
      %p142 = scmp.ne.s32.totalorder %s137, %s139
      %p143 = scmp.eq.s32.totalorder %s19, 0
      %p144 = por %p142, %p143
      %p145 = scmp.ne.s32.totalorder %s137, %s139
      %p146 = scmp.eq.s32.totalorder %s24, 1
      %p147 = por %p145, %p146
      %p148 = scmp.ne.s32.totalorder %s139, %s140
      %p149 = scmp.eq.s32.totalorder %s24, 0
      %p150 = por %p148, %p149
      %p151 = scmp.ne.s32.totalorder %s139, %s140
      %p152 = scmp.eq.s32.totalorder %s25, 1
      %p153 = por %p151, %p152
      %p155 = scmp.ne.s32.totalorder %s140, %s154
      %p156 = scmp.eq.s32.totalorder %s25, 0
      %p157 = por %p155, %p156
      %s158 = ssub.s32 %s19, %s26
      %p159 = scmp.eq.s32.totalorder %s158, 0
      %s161 = sadd.s32 %s160, 1
      %s162 = scalar_select %p159, %s160, %s161
      %p165 = pneg %p159
      %p166 = scmp.eq.s32.totalorder %s19, 1
      %p167 = por %p165, %p166
      %p168 = scmp.ne.s32.totalorder %s160, %s163
      %p169 = scmp.eq.s32.totalorder %s19, 0
      %p170 = por %p168, %p169
      %p171 = scmp.ne.s32.totalorder %s160, %s163
      %p172 = scmp.eq.s32.totalorder %s24, 1
      %p173 = por %p171, %p172
      %p174 = scmp.ne.s32.totalorder %s163, %s164
      %p175 = scmp.eq.s32.totalorder %s24, 0
      %p176 = por %p174, %p175
      %p177 = scmp.ne.s32.totalorder %s163, %s164
      %p178 = scmp.eq.s32.totalorder %s25, 1
      %p179 = por %p177, %p178
      %p181 = scmp.ne.s32.totalorder %s164, %s180
      %p182 = scmp.eq.s32.totalorder %s25, 0
      %p183 = por %p181, %p182
      %p184 = scmp.le.s32.totalorder 1, %s19
      %p185 = scmp.lt.s32.totalorder %s19, 3
      %p186 = pnand %p184, %p185
      %p187 = pneg %p186
      // Predicated region
      $region9: #{tpu_custom_call.1} parent=5 // pred_check
        _
      $region10: #{tpu_custom_call.1} parent=5 // pred_check_branch
        %189 = sbr.rel (%p186) target = $region12
      $region11: #{tpu_custom_call.1} parent=5 // pred_region
        %s190 = ssub.s32 %s19, 1
        // Predicated region
        $region13: #{tpu_custom_call.1} parent=11 // pred_check
          %p191 = pneg %p66
        $region14: #{tpu_custom_call.1} parent=11 // pred_check_branch
          %193 = sbr.rel (%p191) target = $region16
        $region15: #{tpu_custom_call.1} parent=11 // pred_region
          _
        $region16: #{tpu_custom_call.1} parent=11 // pred_fallthru
          _
        // Predicated region
        $region17: #{tpu_custom_call.1} parent=11 // pred_check
          %p194 = pneg %p87
        $region18: #{tpu_custom_call.1} parent=11 // pred_check_branch
          %196 = sbr.rel (%p194) target = $region20
        $region19: #{tpu_custom_call.1} parent=11 // pred_region
          _
        $region20: #{tpu_custom_call.1} parent=11 // pred_fallthru
          _
        // Predicated region
        $region21: #{tpu_custom_call.1} parent=11 // pred_check
          %p197 = pneg %p108
        $region22: #{tpu_custom_call.1} parent=11 // pred_check_branch
          %199 = sbr.rel (%p197) target = $region24
        $region23: #{tpu_custom_call.1} parent=11 // pred_region
          %s201 = ssub.s32 256, 256
          %202 = vsyncadd [#allocation6], %s201
          %s203 = sshll.u32 [#allocation5], 4
          %s204 = int_to_ptr.vmem [resolvable:$true] %s203
          %209 = dma.hbm_to_vmem [thread:$0]  %s3, 256, %s204, [#allocation6], 64, 64, 4
        $region24: #{tpu_custom_call.1} parent=11 // pred_fallthru
          _
        // Predicated region
        $region25: #{tpu_custom_call.1} parent=11 // pred_check
          %p210 = pneg %p129
        $region26: #{tpu_custom_call.1} parent=11 // pred_check_branch
          %212 = sbr.rel (%p210) target = $region28
        $region27: #{tpu_custom_call.1} parent=11 // pred_region
          %s214 = ssub.s32 256, 256
          %215 = vsyncadd [#allocation6], %s214
          %s216 = sshll.u32 [#allocation7], 4
          %s217 = int_to_ptr.vmem [resolvable:$true] %s216
          %222 = dma.hbm_to_vmem [thread:$0]  %s4, 256, %s217, [#allocation6], 64, 64, 4
        $region28: #{tpu_custom_call.1} parent=11 // pred_fallthru
          _
        // Predicated region
        $region29: #{tpu_custom_call.1} parent=11 // pred_check
          %p223 = pneg %p150
        $region30: #{tpu_custom_call.1} parent=11 // pred_check_branch
          %225 = sbr.rel (%p223) target = $region32
        $region31: #{tpu_custom_call.1} parent=11 // pred_region
          _
        $region32: #{tpu_custom_call.1} parent=11 // pred_fallthru
          _
      $region12: #{tpu_custom_call.1} parent=5 // pred_fallthru
        _
      %p226 = scmp.lt.s32.totalorder %s19, 2
      // Predicated region
      $region33: #{tpu_custom_call.1} parent=5 // pred_check
        %p227 = pneg %p226
      $region34: #{tpu_custom_call.1} parent=5 // pred_check_branch
        %229 = sbr.rel (%p227) target = $region36
      $region35: #{tpu_custom_call.1} parent=5 // pred_region
        // Predicated region
        $region37: #{tpu_custom_call.1} parent=35 // pred_check
          %p230 = pneg %p39
        $region38: #{tpu_custom_call.1} parent=35 // pred_check_branch
          %232 = sbr.rel (%p230) target = $region40
        $region39: #{tpu_custom_call.1} parent=35 // pred_region
          %s233 = sand.u32 %s29, 1
          %s234 = scalar_lea.sflag [#allocation3], %s233
          %s235 = sand.u32 %s29, 1
          %s236 = smul.addr %s235, 8
          %s237 = scalar_lea.vmem [#allocation2], %s236
          %s239 = ssub.s32 128, 128
          %240 = vsyncadd %s234, %s239
          %s241 = smul.addr %s19, 128
          %s242 = scalar_lea.hbm %s0, %s241
          %s244 = sshll.u32 %s237, 4
          %s245 = int_to_ptr.vmem [resolvable:$true] %s244
          %247 = dma.hbm_to_vmem [thread:$0]  %s242, 128, %s245, %s234
        $region40: #{tpu_custom_call.1} parent=35 // pred_fallthru
          _
      $region36: #{tpu_custom_call.1} parent=5 // pred_fallthru
        _
      %p248 = scmp.le.s32.totalorder 1, %s19
      %p249 = scmp.lt.s32.totalorder %s19, 3
      %p250 = pnand %p248, %p249
      %p251 = pneg %p250
      // Predicated region
      $region41: #{tpu_custom_call.1} parent=5 // pred_check
        _
      $region42: #{tpu_custom_call.1} parent=5 // pred_check_branch
        %253 = sbr.rel (%p250) target = $region44
      $region43: #{tpu_custom_call.1} parent=5 // pred_region
        %s254 = ssub.s32 %s19, 1
        %s255 = sand.u32 %s32, 1
        %s256 = scalar_lea.sflag [#allocation3], %s255
        %s257 = sand.u32 %s32, 1
        %s258 = smul.addr %s257, 8
        %s259 = scalar_lea.vmem [#allocation2], %s258
        // Predicated region
        $region45: #{tpu_custom_call.1} parent=43 // pred_check
          %p260 = pneg %p45
        $region46: #{tpu_custom_call.1} parent=43 // pred_check_branch
          %262 = sbr.rel (%p260) target = $region48
        $region47: #{tpu_custom_call.1} parent=43 // pred_region
          %263 = dma.done %s256, 128
        $region48: #{tpu_custom_call.1} parent=43 // pred_fallthru
          _
        // Predicated region
        $region49: #{tpu_custom_call.1} parent=43 // pred_check
          %p264 = pneg %p108
        $region50: #{tpu_custom_call.1} parent=43 // pred_check_branch
          %266 = sbr.rel (%p264) target = $region52
        $region51: #{tpu_custom_call.1} parent=43 // pred_region
          %267 = dma.done [#allocation6], 256
        $region52: #{tpu_custom_call.1} parent=43 // pred_fallthru
          _
        // Predicated region
        $region53: #{tpu_custom_call.1} parent=43 // pred_check
          %p268 = pneg %p129
        $region54: #{tpu_custom_call.1} parent=43 // pred_check_branch
          %270 = sbr.rel (%p268) target = $region56
        $region55: #{tpu_custom_call.1} parent=43 // pred_region
          %271 = dma.done [#allocation6], 256
        $region56: #{tpu_custom_call.1} parent=43 // pred_fallthru
          _
        %s272 = sand.u32 %s32, 1
        %s273 = scalar_lea.sflag [#allocation3], %s272
        %s274 = sand.u32 %s32, 1
        %s275 = smul.addr %s274, 8
        %s276 = scalar_lea.vmem [#allocation2], %s275
        %p277 = pneg %p45
        %p278 = pneg %p42
        %p279 = pneg %p66
        %p280 = pneg %p63
        %p281 = pneg %p87
        %p282 = pneg %p84
        %p283 = pneg %p108
        %p284 = pneg %p105
        %p285 = pneg %p129
        %p286 = pneg %p126
        %p287 = pneg %p150
        %p288 = pneg %p147
        %p289 = pneg %p176
        %p290 = pneg %p173
        %s291 = sand.u32 %s163, 1
        %s292 = scalar_lea.sflag [#allocation4], %s291
        %s293 = sand.u32 %s163, 1
        %s294 = smul.addr %s293, 8
        %s295 = scalar_lea.vmem [#allocation8], %s294
        %v297 = vld [vmem:[%s259] sm:$0xff]
        %v298 = vld [vmem:[%s1] sm:$0x1]
        %v299 = vld [vmem:[%s2] sm:$0x1]
        %vm300 = vcmask 261120
        %v301 = vsel %vm300, %v297, 0.0
        %302 = vadd.xlane.f32.xlu0 %v301
        %v303 = vpop.xlane.xlu0 %302
        %v304 = vrcp.pop 32.0
        %v305 = vmul.f32 %v303, %v304
        %v306 = vsub.f32 %v297, %v305
        %v307 = vmul.f32 %v306, %v306
        %v308 = vsel %vm300, %v307, 0.0
        %309 = vadd.xlane.f32.xlu0 %v308
        %v310 = vpop.xlane.xlu0 %309
        %v311 = vmul.f32 %v310, %v304
        %v312 = vadd.f32 %v311, 1e-05
        %v313 = vrsqrt.pop %v312
        %v314 = vmul.f32 %v312, %v313
        %vm315 = vcmp.eq.f32.partialorder %v312, inf
        %v316 = vsel %vm315, %v312, %v314
        %vm317 = vcmp.eq.f32.partialorder %v312, 0.0
        %v318 = vand.u32 %v312, 2147483648
        %v319 = vsel %vm317, %v318, %v316
        %v320 = vrcp.pop %v319
        %v321 = vmul.f32 %v306, %v320
        %v323 = vlaneseq
        %v324 = vshrl.u32 %v323, 7
        %v325 = vsub.s32 0, %v324
        %v326 = vrot.slane %v298, %v325
        %v328 = vmul.f32 %v326, %v321
        %v330 = vlaneseq
        %v331 = vshrl.u32 %v330, 7
        %v332 = vsub.s32 0, %v331
        %v333 = vrot.slane %v299, %v332
        %v335 = vadd.f32 %v328, %v333
        %v336 = vpack.c.bf16 %v335, %v335
        %v337 = vld [vmem:[#allocation5] sm:$0xf]
        %v338 = vld [vmem:[#allocation5 + $0x4] sm:$0xf]
        %v339 = vld [vmem:[#allocation5 + $0x8] sm:$0xf]
        %v340 = vld [vmem:[#allocation5 + $0xc] sm:$0xf]
        %v345 = vunpack.c.l.b16 %v337
        %v346 = vunpack.c.l.b16 %v338
        %v347 = vunpack.c.l.b16 %v339
        %v348 = vunpack.c.l.b16 %v340
        %v349 = vpack.c.b16 %v346, %v345
        %v350 = vpack.c.b16 %v348, %v347
        %v354 = vsel %vm300, %v336, 0
        %356 = vmatprep.subr.bf16.mxu0 0
        %357 = vmatpush1.bf16.msra.mxu0 %v349
        %358 = vmatprep.subr.bf16.mxu0 0
        %359 = vmatpush1.bf16.msra.mxu0 %v350
        %360 = vmatprep.subr.bf16.mxu0 0
        %361 = vmatpush1.bf16.msra.mxu0 0
        %362 = vmatprep.subr.bf16.mxu0 0
        %363 = vmatpush1.bf16.msra.mxu0 0
        %364 = vmatprep.subr.bf16.mxu0 0
        %365 = vmatpush1.bf16.msra.mxu0 0
        %366 = vmatprep.subr.bf16.mxu0 0
        %367 = vmatpush1.bf16.msra.mxu0 0
        %368 = vmatprep.subr.bf16.mxu0 0
        %369 = vmatpush1.bf16.msra.mxu0 0
        %370 = vmatprep.subr.bf16.mxu0 0
        %371 = vmatpush1.bf16.msra.mxu0 0
        %372 = vmatprep.subr.bf16.mxu0 0
        %373 = vmatpush1.bf16.msra.mxu0 0
        %374 = vmatprep.subr.bf16.mxu0 0
        %375 = vmatpush1.bf16.msra.mxu0 0
        %376 = vmatprep.subr.bf16.mxu0 0
        %377 = vmatpush1.bf16.msra.mxu0 0
        %378 = vmatprep.subr.bf16.mxu0 0
        %379 = vmatpush1.bf16.msra.mxu0 0
        %380 = vmatprep.subr.bf16.mxu0 0
        %381 = vmatpush1.bf16.msra.mxu0 0
        %382 = vmatprep.subr.bf16.mxu0 0
        %383 = vmatpush1.bf16.msra.mxu0 0
        %384 = vmatprep.subr.bf16.mxu0 0
        %385 = vmatpush1.bf16.msra.mxu0 0
        %386 = vmatprep.subr.bf16.mxu0 0
        %387 = vmatpush1.bf16.msra.mxu0 0
        %388 = vmatprep.mubr.bf16.mxu0 0
        %389 = vmatmul.mubr.bf16.gmra.mrb[0].mxu0 %v354
        %v390 = vpop.f32.mrb[0].mxu0
        %v391 = vadd.f32 0.0, %v390
        %v392 = vpop.f32.mrb[0].mxu0
        %v393 = vpop.f32.mrb[0].mxu0
        %v394 = vpop.f32.mrb[0].mxu0
        %395 = vdwg.mxu0
        %v396 = vmul.f32 %v391, 0.35355338
        %398 = vrot.lane.b32.xlu0 %v396, 120
        %v399 = vpop.permute.xlu0 %398
        %401 = vrot.lane.b32.xlu0 %v396, 112
        %v402 = vpop.permute.xlu0 %401
        %404 = vrot.lane.b32.xlu0 %v396, 104
        %v405 = vpop.permute.xlu0 %404
        %v407 = vcombine.low %v396, %v402
        %v408 = vcombine.high %v396, %v402
        %v410 = vunpack.c.l.s4 1983009808
        %v411 = vunpack.c.0.s8 %v410
        %v412 = vlaneseq
        %v413 = vshrl.u32 %v412, 7
        %v414 = vsub.s32 %v411, %v413
        %v415 = vrot.slane %v407, %v414
        %v417 = vunpack.c.l.s4 1983009808
        %v418 = vunpack.c.0.s8 %v417
        %v419 = vlaneseq
        %v420 = vshrl.u32 %v419, 7
        %v421 = vsub.s32 %v418, %v420
        %v422 = vrot.slane %v408, %v421
        %v423 = vcombine.low %v399, %v405
        %v424 = vcombine.high %v399, %v405
        %v426 = vunpack.c.l.s4 1983009808
        %v427 = vunpack.c.0.s8 %v426
        %v428 = vlaneseq
        %v429 = vshrl.u32 %v428, 7
        %v430 = vsub.s32 %v427, %v429
        %v431 = vrot.slane %v423, %v430
        %v433 = vunpack.c.l.s4 1983009808
        %v434 = vunpack.c.0.s8 %v433
        %v435 = vlaneseq
        %v436 = vshrl.u32 %v435, 7
        %v437 = vsub.s32 %v434, %v436
        %v438 = vrot.slane %v424, %v437
        %v439 = vcombine.low %v415, %v431
        %v440 = vcombine.high %v415, %v431
        %v442 = vunpack.c.l.s4 1934713408
        %v443 = vunpack.c.0.s8 %v442
        %v444 = vlaneseq
        %v445 = vshrl.u32 %v444, 7
        %v446 = vsub.s32 %v443, %v445
        %v447 = vrot.slane %v439, %v446
        %v449 = vunpack.c.l.s4 1934713408
        %v450 = vunpack.c.0.s8 %v449
        %v451 = vlaneseq
        %v452 = vshrl.u32 %v451, 7
        %v453 = vsub.s32 %v450, %v452
        %v454 = vrot.slane %v440, %v453
        %v455 = vcombine.low %v422, %v438
        %v456 = vcombine.high %v422, %v438
        %v458 = vunpack.c.l.s4 1934713408
        %v459 = vunpack.c.0.s8 %v458
        %v460 = vlaneseq
        %v461 = vshrl.u32 %v460, 7
        %v462 = vsub.s32 %v459, %v461
        %v463 = vrot.slane %v455, %v462
        %v465 = vunpack.c.l.s4 1934713408
        %v466 = vunpack.c.0.s8 %v465
        %v467 = vlaneseq
        %v468 = vshrl.u32 %v467, 7
        %v469 = vsub.s32 %v466, %v468
        %v470 = vrot.slane %v456, %v469
        %v471 = vcombine.high %v447, 0.0
        %v472 = vcombine.high %v454, 0.0
        %v473 = vcombine.high %v463, 0.0
        %v474 = vcombine.high %v470, 0.0
        %v475 = vcombine.low %v447, %v454
        %v477 = vunpack.c.l.s4 1983009808
        %v478 = vunpack.c.0.s8 %v477
        %v479 = vlaneseq
        %v480 = vshrl.u32 %v479, 7
        %v481 = vsub.s32 %v478, %v480
        %v482 = vrot.slane %v475, %v481
        %v483 = vcombine.low %v471, %v472
        %v485 = vunpack.c.l.s4 1983009808
        %v486 = vunpack.c.0.s8 %v485
        %v487 = vlaneseq
        %v488 = vshrl.u32 %v487, 7
        %v489 = vsub.s32 %v486, %v488
        %v490 = vrot.slane %v483, %v489
        %v491 = vcombine.low %v463, %v470
        %v493 = vunpack.c.l.s4 1983009808
        %v494 = vunpack.c.0.s8 %v493
        %v495 = vlaneseq
        %v496 = vshrl.u32 %v495, 7
        %v497 = vsub.s32 %v494, %v496
        %v498 = vrot.slane %v491, %v497
        %v499 = vcombine.low %v473, %v474
        %v501 = vunpack.c.l.s4 1983009808
        %v502 = vunpack.c.0.s8 %v501
        %v503 = vlaneseq
        %v504 = vshrl.u32 %v503, 7
        %v505 = vsub.s32 %v502, %v504
        %v506 = vrot.slane %v499, %v505
        %v507 = vcombine.low %v482, %v490
        %v508 = vcombine.high %v482, %v490
        %v510 = vunpack.c.l.s4 1934713408
        %v511 = vunpack.c.0.s8 %v510
        %v512 = vlaneseq
        %v513 = vshrl.u32 %v512, 7
        %v514 = vsub.s32 %v511, %v513
        %v515 = vrot.slane %v507, %v514
        %v517 = vunpack.c.l.s4 1934713408
        %v518 = vunpack.c.0.s8 %v517
        %v519 = vlaneseq
        %v520 = vshrl.u32 %v519, 7
        %v521 = vsub.s32 %v518, %v520
        %v522 = vrot.slane %v508, %v521
        %v523 = vcombine.low %v498, %v506
        %v524 = vcombine.high %v498, %v506
        %v526 = vunpack.c.l.s4 1934713408
        %v527 = vunpack.c.0.s8 %v526
        %v528 = vlaneseq
        %v529 = vshrl.u32 %v528, 7
        %v530 = vsub.s32 %v527, %v529
        %v531 = vrot.slane %v523, %v530
        %v533 = vunpack.c.l.s4 1934713408
        %v534 = vunpack.c.0.s8 %v533
        %v535 = vlaneseq
        %v536 = vshrl.u32 %v535, 7
        %v537 = vsub.s32 %v534, %v536
        %v538 = vrot.slane %v524, %v537
        %v539 = vcombine.low %v515, %v531
        %v540 = vcombine.high %v515, %v531
        %v541 = vcombine.low %v522, %v538
        %v542 = vcombine.high %v522, %v538
        %v543 = vpack.c.bf16 %v539, %v539
        %v544 = vpack.c.bf16 %v540, %v540
        %v545 = vpack.c.bf16 %v541, %v541
        %v546 = vpack.c.bf16 %v542, %v542
        %548 = vrot.lane.b32.xlu0 %v391, 120
        %v549 = vpop.permute.xlu0 %548
        %550 = vrot.lane.b32.xlu0 %v391, 112
        %v551 = vpop.permute.xlu0 %550
        %552 = vrot.lane.b32.xlu0 %v391, 104
        %v553 = vpop.permute.xlu0 %552
        %554 = vrot.lane.b32.xlu0 %v391, 96
        %v555 = vpop.permute.xlu0 %554
        %556 = vrot.lane.b32.xlu0 %v549, 96
        %v557 = vpop.permute.xlu0 %556
        %558 = vrot.lane.b32.xlu0 %v551, 96
        %v559 = vpop.permute.xlu0 %558
        %560 = vrot.lane.b32.xlu0 %v553, 96
        %v561 = vpop.permute.xlu0 %560
        %v566 = vcombine.low %v555, %v559
        %v567 = vcombine.high %v555, %v559
        %v569 = vunpack.c.l.s4 1983009808
        %v570 = vunpack.c.0.s8 %v569
        %v571 = vlaneseq
        %v572 = vshrl.u32 %v571, 7
        %v573 = vsub.s32 %v570, %v572
        %v574 = vrot.slane %v566, %v573
        %v576 = vunpack.c.l.s4 1983009808
        %v577 = vunpack.c.0.s8 %v576
        %v578 = vlaneseq
        %v579 = vshrl.u32 %v578, 7
        %v580 = vsub.s32 %v577, %v579
        %v581 = vrot.slane %v567, %v580
        %v582 = vcombine.low %v557, %v561
        %v583 = vcombine.high %v557, %v561
        %v585 = vunpack.c.l.s4 1983009808
        %v586 = vunpack.c.0.s8 %v585
        %v587 = vlaneseq
        %v588 = vshrl.u32 %v587, 7
        %v589 = vsub.s32 %v586, %v588
        %v590 = vrot.slane %v582, %v589
        %v592 = vunpack.c.l.s4 1983009808
        %v593 = vunpack.c.0.s8 %v592
        %v594 = vlaneseq
        %v595 = vshrl.u32 %v594, 7
        %v596 = vsub.s32 %v593, %v595
        %v597 = vrot.slane %v583, %v596
        %v598 = vcombine.low %v574, %v590
        %v599 = vcombine.high %v574, %v590
        %v601 = vunpack.c.l.s4 1934713408
        %v602 = vunpack.c.0.s8 %v601
        %v603 = vlaneseq
        %v604 = vshrl.u32 %v603, 7
        %v605 = vsub.s32 %v602, %v604
        %v606 = vrot.slane %v598, %v605
        %v608 = vunpack.c.l.s4 1934713408
        %v609 = vunpack.c.0.s8 %v608
        %v610 = vlaneseq
        %v611 = vshrl.u32 %v610, 7
        %v612 = vsub.s32 %v609, %v611
        %v613 = vrot.slane %v599, %v612
        %v614 = vcombine.low %v581, %v597
        %v615 = vcombine.high %v581, %v597
        %v617 = vunpack.c.l.s4 1934713408
        %v618 = vunpack.c.0.s8 %v617
        %v619 = vlaneseq
        %v620 = vshrl.u32 %v619, 7
        %v621 = vsub.s32 %v618, %v620
        %v622 = vrot.slane %v614, %v621
        %v624 = vunpack.c.l.s4 1934713408
        %v625 = vunpack.c.0.s8 %v624
        %v626 = vlaneseq
        %v627 = vshrl.u32 %v626, 7
        %v628 = vsub.s32 %v625, %v627
        %v629 = vrot.slane %v615, %v628
        %v630 = vcombine.high %v606, 0.0
        %v631 = vcombine.high %v613, 0.0
        %v632 = vcombine.high %v622, 0.0
        %v633 = vcombine.high %v629, 0.0
        %v634 = vcombine.low %v606, %v613
        %v636 = vunpack.c.l.s4 1983009808
        %v637 = vunpack.c.0.s8 %v636
        %v638 = vlaneseq
        %v639 = vshrl.u32 %v638, 7
        %v640 = vsub.s32 %v637, %v639
        %v641 = vrot.slane %v634, %v640
        %v642 = vcombine.low %v630, %v631
        %v644 = vunpack.c.l.s4 1983009808
        %v645 = vunpack.c.0.s8 %v644
        %v646 = vlaneseq
        %v647 = vshrl.u32 %v646, 7
        %v648 = vsub.s32 %v645, %v647
        %v649 = vrot.slane %v642, %v648
        %v650 = vcombine.low %v622, %v629
        %v652 = vunpack.c.l.s4 1983009808
        %v653 = vunpack.c.0.s8 %v652
        %v654 = vlaneseq
        %v655 = vshrl.u32 %v654, 7
        %v656 = vsub.s32 %v653, %v655
        %v657 = vrot.slane %v650, %v656
        %v658 = vcombine.low %v632, %v633
        %v660 = vunpack.c.l.s4 1983009808
        %v661 = vunpack.c.0.s8 %v660
        %v662 = vlaneseq
        %v663 = vshrl.u32 %v662, 7
        %v664 = vsub.s32 %v661, %v663
        %v665 = vrot.slane %v658, %v664
        %v666 = vcombine.low %v641, %v649
        %v667 = vcombine.high %v641, %v649
        %v669 = vunpack.c.l.s4 1934713408
        %v670 = vunpack.c.0.s8 %v669
        %v671 = vlaneseq
        %v672 = vshrl.u32 %v671, 7
        %v673 = vsub.s32 %v670, %v672
        %v674 = vrot.slane %v666, %v673
        %v676 = vunpack.c.l.s4 1934713408
        %v677 = vunpack.c.0.s8 %v676
        %v678 = vlaneseq
        %v679 = vshrl.u32 %v678, 7
        %v680 = vsub.s32 %v677, %v679
        %v681 = vrot.slane %v667, %v680
        %v682 = vcombine.low %v657, %v665
        %v683 = vcombine.high %v657, %v665
        %v685 = vunpack.c.l.s4 1934713408
        %v686 = vunpack.c.0.s8 %v685
        %v687 = vlaneseq
        %v688 = vshrl.u32 %v687, 7
        %v689 = vsub.s32 %v686, %v688
        %v690 = vrot.slane %v682, %v689
        %v692 = vunpack.c.l.s4 1934713408
        %v693 = vunpack.c.0.s8 %v692
        %v694 = vlaneseq
        %v695 = vshrl.u32 %v694, 7
        %v696 = vsub.s32 %v693, %v695
        %v697 = vrot.slane %v683, %v696
        %v698 = vcombine.low %v674, %v690
        %v699 = vcombine.high %v674, %v690
        %v700 = vcombine.low %v681, %v697
        %v701 = vcombine.high %v681, %v697
        %v702 = vpack.c.bf16 %v698, %v698
        %v703 = vpack.c.bf16 %v699, %v699
        %v704 = vpack.c.bf16 %v700, %v700
        %v705 = vpack.c.bf16 %v701, %v701
        %706 = vrot.lane.b32.xlu0 %v391, 64
        %v707 = vpop.permute.xlu0 %706
        %708 = vrot.lane.b32.xlu0 %v549, 64
        %v709 = vpop.permute.xlu0 %708
        %710 = vrot.lane.b32.xlu0 %v551, 64
        %v711 = vpop.permute.xlu0 %710
        %712 = vrot.lane.b32.xlu0 %v553, 64
        %v713 = vpop.permute.xlu0 %712
        %v718 = vcombine.low %v707, %v711
        %v719 = vcombine.high %v707, %v711
        %v721 = vunpack.c.l.s4 1983009808
        %v722 = vunpack.c.0.s8 %v721
        %v723 = vlaneseq
        %v724 = vshrl.u32 %v723, 7
        %v725 = vsub.s32 %v722, %v724
        %v726 = vrot.slane %v718, %v725
        %v728 = vunpack.c.l.s4 1983009808
        %v729 = vunpack.c.0.s8 %v728
        %v730 = vlaneseq
        %v731 = vshrl.u32 %v730, 7
        %v732 = vsub.s32 %v729, %v731
        %v733 = vrot.slane %v719, %v732
        %v734 = vcombine.low %v709, %v713
        %v735 = vcombine.high %v709, %v713
        %v737 = vunpack.c.l.s4 1983009808
        %v738 = vunpack.c.0.s8 %v737
        %v739 = vlaneseq
        %v740 = vshrl.u32 %v739, 7
        %v741 = vsub.s32 %v738, %v740
        %v742 = vrot.slane %v734, %v741
        %v744 = vunpack.c.l.s4 1983009808
        %v745 = vunpack.c.0.s8 %v744
        %v746 = vlaneseq
        %v747 = vshrl.u32 %v746, 7
        %v748 = vsub.s32 %v745, %v747
        %v749 = vrot.slane %v735, %v748
        %v750 = vcombine.low %v726, %v742
        %v751 = vcombine.high %v726, %v742
        %v753 = vunpack.c.l.s4 1934713408
        %v754 = vunpack.c.0.s8 %v753
        %v755 = vlaneseq
        %v756 = vshrl.u32 %v755, 7
        %v757 = vsub.s32 %v754, %v756
        %v758 = vrot.slane %v750, %v757
        %v760 = vunpack.c.l.s4 1934713408
        %v761 = vunpack.c.0.s8 %v760
        %v762 = vlaneseq
        %v763 = vshrl.u32 %v762, 7
        %v764 = vsub.s32 %v761, %v763
        %v765 = vrot.slane %v751, %v764
        %v766 = vcombine.low %v733, %v749
        %v767 = vcombine.high %v733, %v749
        %v769 = vunpack.c.l.s4 1934713408
        %v770 = vunpack.c.0.s8 %v769
        %v771 = vlaneseq
        %v772 = vshrl.u32 %v771, 7
        %v773 = vsub.s32 %v770, %v772
        %v774 = vrot.slane %v766, %v773
        %v776 = vunpack.c.l.s4 1934713408
        %v777 = vunpack.c.0.s8 %v776
        %v778 = vlaneseq
        %v779 = vshrl.u32 %v778, 7
        %v780 = vsub.s32 %v777, %v779
        %v781 = vrot.slane %v767, %v780
        %v782 = vcombine.high %v758, 0.0
        %v783 = vcombine.high %v765, 0.0
        %v784 = vcombine.high %v774, 0.0
        %v785 = vcombine.high %v781, 0.0
        %v786 = vcombine.low %v758, %v765
        %v788 = vunpack.c.l.s4 1983009808
        %v789 = vunpack.c.0.s8 %v788
        %v790 = vlaneseq
        %v791 = vshrl.u32 %v790, 7
        %v792 = vsub.s32 %v789, %v791
        %v793 = vrot.slane %v786, %v792
        %v794 = vcombine.low %v782, %v783
        %v796 = vunpack.c.l.s4 1983009808
        %v797 = vunpack.c.0.s8 %v796
        %v798 = vlaneseq
        %v799 = vshrl.u32 %v798, 7
        %v800 = vsub.s32 %v797, %v799
        %v801 = vrot.slane %v794, %v800
        %v802 = vcombine.low %v774, %v781
        %v804 = vunpack.c.l.s4 1983009808
        %v805 = vunpack.c.0.s8 %v804
        %v806 = vlaneseq
        %v807 = vshrl.u32 %v806, 7
        %v808 = vsub.s32 %v805, %v807
        %v809 = vrot.slane %v802, %v808
        %v810 = vcombine.low %v784, %v785
        %v812 = vunpack.c.l.s4 1983009808
        %v813 = vunpack.c.0.s8 %v812
        %v814 = vlaneseq
        %v815 = vshrl.u32 %v814, 7
        %v816 = vsub.s32 %v813, %v815
        %v817 = vrot.slane %v810, %v816
        %v818 = vcombine.low %v793, %v801
        %v819 = vcombine.high %v793, %v801
        %v821 = vunpack.c.l.s4 1934713408
        %v822 = vunpack.c.0.s8 %v821
        %v823 = vlaneseq
        %v824 = vshrl.u32 %v823, 7
        %v825 = vsub.s32 %v822, %v824
        %v826 = vrot.slane %v818, %v825
        %v828 = vunpack.c.l.s4 1934713408
        %v829 = vunpack.c.0.s8 %v828
        %v830 = vlaneseq
        %v831 = vshrl.u32 %v830, 7
        %v832 = vsub.s32 %v829, %v831
        %v833 = vrot.slane %v819, %v832
        %v834 = vcombine.low %v809, %v817
        %v835 = vcombine.high %v809, %v817
        %v837 = vunpack.c.l.s4 1934713408
        %v838 = vunpack.c.0.s8 %v837
        %v839 = vlaneseq
        %v840 = vshrl.u32 %v839, 7
        %v841 = vsub.s32 %v838, %v840
        %v842 = vrot.slane %v834, %v841
        %v844 = vunpack.c.l.s4 1934713408
        %v845 = vunpack.c.0.s8 %v844
        %v846 = vlaneseq
        %v847 = vshrl.u32 %v846, 7
        %v848 = vsub.s32 %v845, %v847
        %v849 = vrot.slane %v835, %v848
        %v850 = vcombine.low %v826, %v842
        %v851 = vcombine.high %v826, %v842
        %v852 = vcombine.low %v833, %v849
        %v853 = vcombine.high %v833, %v849
        %v854 = vpack.c.bf16 %v850, %v850
        %v855 = vpack.c.bf16 %v851, %v851
        %v856 = vpack.c.bf16 %v852, %v852
        %v857 = vpack.c.bf16 %v853, %v853
        %v858 = vlaneseq
        %v859 = vshrl.u32 %v858, 7
        %v860 = vlaneseq
        %v861 = vand.u32 %v860, 127
        %vm862 = vcmp.gt.s32.totalorder %v861, %v859
        %v863 = vsel %vm862, -1e+30, 0.0
        %vm864 = vcmask 64512
        %v866 = vsel %vm864, %v543, 0
        %v869 = vsel %vm864, %v702, 0
        %871 = vmatprep.subr.bf16.mxu0 0
        %872 = vmatpush1.bf16.xpose.msra.mxu0 %v869
        %873 = vmatprep.subr.bf16.mxu0 0
        %874 = vmatpush1.bf16.xpose.msra.mxu0 0
        %875 = vmatprep.subr.bf16.mxu0 0
        %876 = vmatpush1.bf16.xpose.msra.mxu0 0
        %877 = vmatprep.subr.bf16.mxu0 0
        %878 = vmatpush1.bf16.xpose.msra.mxu0 0
        %879 = vmatprep.subr.bf16.mxu0 0
        %880 = vmatpush1.bf16.xpose.msra.mxu0 0
        %881 = vmatprep.subr.bf16.mxu0 0
        %882 = vmatpush1.bf16.xpose.msra.mxu0 0
        %883 = vmatprep.subr.bf16.mxu0 0
        %884 = vmatpush1.bf16.xpose.msra.mxu0 0
        %885 = vmatprep.subr.bf16.mxu0 0
        %886 = vmatpush1.bf16.xpose.msra.mxu0 0
        %887 = vmatprep.subr.bf16.mxu0 0
        %888 = vmatpush1.bf16.xpose.msra.mxu0 0
        %889 = vmatprep.subr.bf16.mxu0 0
        %890 = vmatpush1.bf16.xpose.msra.mxu0 0
        %891 = vmatprep.subr.bf16.mxu0 0
        %892 = vmatpush1.bf16.xpose.msra.mxu0 0
        %893 = vmatprep.subr.bf16.mxu0 0
        %894 = vmatpush1.bf16.xpose.msra.mxu0 0
        %895 = vmatprep.subr.bf16.mxu0 0
        %896 = vmatpush1.bf16.xpose.msra.mxu0 0
        %897 = vmatprep.subr.bf16.mxu0 0
        %898 = vmatpush1.bf16.xpose.msra.mxu0 0
        %899 = vmatprep.subr.bf16.mxu0 0
        %900 = vmatpush1.bf16.xpose.msra.mxu0 0
        %901 = vmatprep.subr.bf16.mxu0 0
        %902 = vmatpush1.bf16.xpose.msra.mxu0 0
        %903 = vmatprep.mubr.bf16.mxu0 0
        %904 = vmatmul.mubr.bf16.gmra.mrb[0].mxu0 %v866
        %v905 = vpop.f32.mrb[0].mxu0
        %v906 = vadd.f32 %v863, %v905
        %v907 = vpop.f32.mrb[0].mxu0
        %v908 = vpop.f32.mrb[0].mxu0
        %v909 = vpop.f32.mrb[0].mxu0
        %910 = vdwg.mxu0
        %v912 = vsel %vm864, %v544, 0
        %v915 = vsel %vm864, %v703, 0
        %917 = vmatprep.subr.bf16.mxu0 0
        %918 = vmatpush1.bf16.xpose.msra.mxu0 %v915
        %919 = vmatprep.subr.bf16.mxu0 0
        %920 = vmatpush1.bf16.xpose.msra.mxu0 0
        %921 = vmatprep.subr.bf16.mxu0 0
        %922 = vmatpush1.bf16.xpose.msra.mxu0 0
        %923 = vmatprep.subr.bf16.mxu0 0
        %924 = vmatpush1.bf16.xpose.msra.mxu0 0
        %925 = vmatprep.subr.bf16.mxu0 0
        %926 = vmatpush1.bf16.xpose.msra.mxu0 0
        %927 = vmatprep.subr.bf16.mxu0 0
        %928 = vmatpush1.bf16.xpose.msra.mxu0 0
        %929 = vmatprep.subr.bf16.mxu0 0
        %930 = vmatpush1.bf16.xpose.msra.mxu0 0
        %931 = vmatprep.subr.bf16.mxu0 0
        %932 = vmatpush1.bf16.xpose.msra.mxu0 0
        %933 = vmatprep.subr.bf16.mxu0 0
        %934 = vmatpush1.bf16.xpose.msra.mxu0 0
        %935 = vmatprep.subr.bf16.mxu0 0
        %936 = vmatpush1.bf16.xpose.msra.mxu0 0
        %937 = vmatprep.subr.bf16.mxu0 0
        %938 = vmatpush1.bf16.xpose.msra.mxu0 0
        %939 = vmatprep.subr.bf16.mxu0 0
        %940 = vmatpush1.bf16.xpose.msra.mxu0 0
        %941 = vmatprep.subr.bf16.mxu0 0
        %942 = vmatpush1.bf16.xpose.msra.mxu0 0
        %943 = vmatprep.subr.bf16.mxu0 0
        %944 = vmatpush1.bf16.xpose.msra.mxu0 0
        %945 = vmatprep.subr.bf16.mxu0 0
        %946 = vmatpush1.bf16.xpose.msra.mxu0 0
        %947 = vmatprep.subr.bf16.mxu0 0
        %948 = vmatpush1.bf16.xpose.msra.mxu0 0
        %949 = vmatprep.mubr.bf16.mxu0 0
        %950 = vmatmul.mubr.bf16.gmra.mrb[0].mxu0 %v912
        %v951 = vpop.f32.mrb[0].mxu0
        %v952 = vadd.f32 %v863, %v951
        %v953 = vpop.f32.mrb[0].mxu0
        %v954 = vpop.f32.mrb[0].mxu0
        %v955 = vpop.f32.mrb[0].mxu0
        %956 = vdwg.mxu0
        %v958 = vsel %vm864, %v545, 0
        %v961 = vsel %vm864, %v704, 0
        %963 = vmatprep.subr.bf16.mxu0 0
        %964 = vmatpush1.bf16.xpose.msra.mxu0 %v961
        %965 = vmatprep.subr.bf16.mxu0 0
        %966 = vmatpush1.bf16.xpose.msra.mxu0 0
        %967 = vmatprep.subr.bf16.mxu0 0
        %968 = vmatpush1.bf16.xpose.msra.mxu0 0
        %969 = vmatprep.subr.bf16.mxu0 0
        %970 = vmatpush1.bf16.xpose.msra.mxu0 0
        %971 = vmatprep.subr.bf16.mxu0 0
        %972 = vmatpush1.bf16.xpose.msra.mxu0 0
        %973 = vmatprep.subr.bf16.mxu0 0
        %974 = vmatpush1.bf16.xpose.msra.mxu0 0
        %975 = vmatprep.subr.bf16.mxu0 0
        %976 = vmatpush1.bf16.xpose.msra.mxu0 0
        %977 = vmatprep.subr.bf16.mxu0 0
        %978 = vmatpush1.bf16.xpose.msra.mxu0 0
        %979 = vmatprep.subr.bf16.mxu0 0
        %980 = vmatpush1.bf16.xpose.msra.mxu0 0
        %981 = vmatprep.subr.bf16.mxu0 0
        %982 = vmatpush1.bf16.xpose.msra.mxu0 0
        %983 = vmatprep.subr.bf16.mxu0 0
        %984 = vmatpush1.bf16.xpose.msra.mxu0 0
        %985 = vmatprep.subr.bf16.mxu0 0
        %986 = vmatpush1.bf16.xpose.msra.mxu0 0
        %987 = vmatprep.subr.bf16.mxu0 0
        %988 = vmatpush1.bf16.xpose.msra.mxu0 0
        %989 = vmatprep.subr.bf16.mxu0 0
        %990 = vmatpush1.bf16.xpose.msra.mxu0 0
        %991 = vmatprep.subr.bf16.mxu0 0
        %992 = vmatpush1.bf16.xpose.msra.mxu0 0
        %993 = vmatprep.subr.bf16.mxu0 0
        %994 = vmatpush1.bf16.xpose.msra.mxu0 0
        %995 = vmatprep.mubr.bf16.mxu0 0
        %996 = vmatmul.mubr.bf16.gmra.mrb[0].mxu0 %v958
        %v997 = vpop.f32.mrb[0].mxu0
        %v998 = vadd.f32 %v863, %v997
        %v999 = vpop.f32.mrb[0].mxu0
        %v1000 = vpop.f32.mrb[0].mxu0
        %v1001 = vpop.f32.mrb[0].mxu0
        %1002 = vdwg.mxu0
        %v1004 = vsel %vm864, %v546, 0
        %v1007 = vsel %vm864, %v705, 0
        %1009 = vmatprep.subr.bf16.mxu0 0
        %1010 = vmatpush1.bf16.xpose.msra.mxu0 %v1007
        %1011 = vmatprep.subr.bf16.mxu0 0
        %1012 = vmatpush1.bf16.xpose.msra.mxu0 0
        %1013 = vmatprep.subr.bf16.mxu0 0
        %1014 = vmatpush1.bf16.xpose.msra.mxu0 0
        %1015 = vmatprep.subr.bf16.mxu0 0
        %1016 = vmatpush1.bf16.xpose.msra.mxu0 0
        %1017 = vmatprep.subr.bf16.mxu0 0
        %1018 = vmatpush1.bf16.xpose.msra.mxu0 0
        %1019 = vmatprep.subr.bf16.mxu0 0
        %1020 = vmatpush1.bf16.xpose.msra.mxu0 0
        %1021 = vmatprep.subr.bf16.mxu0 0
        %1022 = vmatpush1.bf16.xpose.msra.mxu0 0
        %1023 = vmatprep.subr.bf16.mxu0 0
        %1024 = vmatpush1.bf16.xpose.msra.mxu0 0
        %1025 = vmatprep.subr.bf16.mxu0 0
        %1026 = vmatpush1.bf16.xpose.msra.mxu0 0
        %1027 = vmatprep.subr.bf16.mxu0 0
        %1028 = vmatpush1.bf16.xpose.msra.mxu0 0
        %1029 = vmatprep.subr.bf16.mxu0 0
        %1030 = vmatpush1.bf16.xpose.msra.mxu0 0
        %1031 = vmatprep.subr.bf16.mxu0 0
        %1032 = vmatpush1.bf16.xpose.msra.mxu0 0
        %1033 = vmatprep.subr.bf16.mxu0 0
        %1034 = vmatpush1.bf16.xpose.msra.mxu0 0
        %1035 = vmatprep.subr.bf16.mxu0 0
        %1036 = vmatpush1.bf16.xpose.msra.mxu0 0
        %1037 = vmatprep.subr.bf16.mxu0 0
        %1038 = vmatpush1.bf16.xpose.msra.mxu0 0
        %1039 = vmatprep.subr.bf16.mxu0 0
        %1040 = vmatpush1.bf16.xpose.msra.mxu0 0
        %1041 = vmatprep.mubr.bf16.mxu0 0
        %1042 = vmatmul.mubr.bf16.gmra.mrb[0].mxu0 %v1004
        %v1043 = vpop.f32.mrb[0].mxu0
        %v1044 = vadd.f32 %v863, %v1043
        %v1045 = vpop.f32.mrb[0].mxu0
        %v1046 = vpop.f32.mrb[0].mxu0
        %v1047 = vpop.f32.mrb[0].mxu0
        %1048 = vdwg.mxu0
        %v1049 = vsel %vm864, %v906, -inf
        %1050 = vmax.xlane.f32.xlu0 %v1049
        %v1051 = vpop.xlane.xlu0 %1050
        %v1052 = vsel %vm864, %v952, -inf
        %1053 = vmax.xlane.f32.xlu0 %v1052
        %v1054 = vpop.xlane.xlu0 %1053
        %v1055 = vsel %vm864, %v998, -inf
        %1056 = vmax.xlane.f32.xlu0 %v1055
        %v1057 = vpop.xlane.xlu0 %1056
        %v1058 = vsel %vm864, %v1044, -inf
        %1059 = vmax.xlane.f32.xlu0 %v1058
        %v1060 = vpop.xlane.xlu0 %1059
        %v1061 = vsub.f32 %v906, %v1051
        %v1062 = vsub.f32 %v952, %v1054
        %v1063 = vsub.f32 %v998, %v1057
        %v1064 = vsub.f32 %v1044, %v1060
        %v1065 = vmul.f32 %v1061, 1.442695
        %v1066 = vpow.pop %v1065
        %v1067 = vmul.f32 %v1062, 1.442695
        %v1068 = vpow.pop %v1067
        %v1069 = vmul.f32 %v1063, 1.442695
        %v1070 = vpow.pop %v1069
        %v1071 = vmul.f32 %v1064, 1.442695
        %v1072 = vpow.pop %v1071
        %v1073 = vsel %vm864, %v1066, 0.0
        %1074 = vadd.xlane.f32.xlu0 %v1073
        %v1075 = vpop.xlane.xlu0 %1074
        %v1076 = vsel %vm864, %v1068, 0.0
        %1077 = vadd.xlane.f32.xlu0 %v1076
        %v1078 = vpop.xlane.xlu0 %1077
        %v1079 = vsel %vm864, %v1070, 0.0
        %1080 = vadd.xlane.f32.xlu0 %v1079
        %v1081 = vpop.xlane.xlu0 %1080
        %v1082 = vsel %vm864, %v1072, 0.0
        %1083 = vadd.xlane.f32.xlu0 %v1082
        %v1084 = vpop.xlane.xlu0 %1083
        %v1085 = vrcp.pop %v1075
        %v1086 = vrcp.pop %v1078
        %v1087 = vrcp.pop %v1081
        %v1088 = vrcp.pop %v1084
        %v1089 = vmul.f32 %v1066, %v1085
        %v1090 = vmul.f32 %v1068, %v1086
        %v1091 = vmul.f32 %v1070, %v1087
        %v1092 = vmul.f32 %v1072, %v1088
        %v1093 = vpack.c.bf16 %v1089, %v1089
        %v1094 = vpack.c.bf16 %v1090, %v1090
        %v1095 = vpack.c.bf16 %v1091, %v1091
        %v1096 = vpack.c.bf16 %v1092, %v1092
        %v1098 = vsel %vm864, %v1093, 0
        %vm1100 = vcmask 1043456
        %v1102 = vsel %vm1100, %v854, 0
        %1104 = vmatprep.subr.bf16.mxu0 0
        %1105 = vmatpush1.bf16.msra.mxu0 %v1102
        %1106 = vmatprep.subr.bf16.mxu0 0
        %1107 = vmatpush1.bf16.msra.mxu0 0
        %1108 = vmatprep.subr.bf16.mxu0 0
        %1109 = vmatpush1.bf16.msra.mxu0 0
        %1110 = vmatprep.subr.bf16.mxu0 0
        %1111 = vmatpush1.bf16.msra.mxu0 0
        %1112 = vmatprep.subr.bf16.mxu0 0
        %1113 = vmatpush1.bf16.msra.mxu0 0
        %1114 = vmatprep.subr.bf16.mxu0 0
        %1115 = vmatpush1.bf16.msra.mxu0 0
        %1116 = vmatprep.subr.bf16.mxu0 0
        %1117 = vmatpush1.bf16.msra.mxu0 0
        %1118 = vmatprep.subr.bf16.mxu0 0
        %1119 = vmatpush1.bf16.msra.mxu0 0
        %1120 = vmatprep.subr.bf16.mxu0 0
        %1121 = vmatpush1.bf16.msra.mxu0 0
        %1122 = vmatprep.subr.bf16.mxu0 0
        %1123 = vmatpush1.bf16.msra.mxu0 0
        %1124 = vmatprep.subr.bf16.mxu0 0
        %1125 = vmatpush1.bf16.msra.mxu0 0
        %1126 = vmatprep.subr.bf16.mxu0 0
        %1127 = vmatpush1.bf16.msra.mxu0 0
        %1128 = vmatprep.subr.bf16.mxu0 0
        %1129 = vmatpush1.bf16.msra.mxu0 0
        %1130 = vmatprep.subr.bf16.mxu0 0
        %1131 = vmatpush1.bf16.msra.mxu0 0
        %1132 = vmatprep.subr.bf16.mxu0 0
        %1133 = vmatpush1.bf16.msra.mxu0 0
        %1134 = vmatprep.subr.bf16.mxu0 0
        %1135 = vmatpush1.bf16.msra.mxu0 0
        %1136 = vmatprep.mubr.bf16.mxu0 0
        %1137 = vmatmul.mubr.bf16.gmra.mrb[0].mxu0 %v1098
        %v1138 = vpop.f32.mrb[0].mxu0
        %v1139 = vadd.f32 0.0, %v1138
        %v1140 = vpop.f32.mrb[0].mxu0
        %v1141 = vpop.f32.mrb[0].mxu0
        %v1142 = vpop.f32.mrb[0].mxu0
        %1143 = vdwg.mxu0
        %v1145 = vsel %vm864, %v1094, 0
        %v1148 = vsel %vm1100, %v855, 0
        %1150 = vmatprep.subr.bf16.mxu0 0
        %1151 = vmatpush1.bf16.msra.mxu0 %v1148
        %1152 = vmatprep.subr.bf16.mxu0 0
        %1153 = vmatpush1.bf16.msra.mxu0 0
        %1154 = vmatprep.subr.bf16.mxu0 0
        %1155 = vmatpush1.bf16.msra.mxu0 0
        %1156 = vmatprep.subr.bf16.mxu0 0
        %1157 = vmatpush1.bf16.msra.mxu0 0
        %1158 = vmatprep.subr.bf16.mxu0 0
        %1159 = vmatpush1.bf16.msra.mxu0 0
        %1160 = vmatprep.subr.bf16.mxu0 0
        %1161 = vmatpush1.bf16.msra.mxu0 0
        %1162 = vmatprep.subr.bf16.mxu0 0
        %1163 = vmatpush1.bf16.msra.mxu0 0
        %1164 = vmatprep.subr.bf16.mxu0 0
        %1165 = vmatpush1.bf16.msra.mxu0 0
        %1166 = vmatprep.subr.bf16.mxu0 0
        %1167 = vmatpush1.bf16.msra.mxu0 0
        %1168 = vmatprep.subr.bf16.mxu0 0
        %1169 = vmatpush1.bf16.msra.mxu0 0
        %1170 = vmatprep.subr.bf16.mxu0 0
        %1171 = vmatpush1.bf16.msra.mxu0 0
        %1172 = vmatprep.subr.bf16.mxu0 0
        %1173 = vmatpush1.bf16.msra.mxu0 0
        %1174 = vmatprep.subr.bf16.mxu0 0
        %1175 = vmatpush1.bf16.msra.mxu0 0
        %1176 = vmatprep.subr.bf16.mxu0 0
        %1177 = vmatpush1.bf16.msra.mxu0 0
        %1178 = vmatprep.subr.bf16.mxu0 0
        %1179 = vmatpush1.bf16.msra.mxu0 0
        %1180 = vmatprep.subr.bf16.mxu0 0
        %1181 = vmatpush1.bf16.msra.mxu0 0
        %1182 = vmatprep.mubr.bf16.mxu0 0
        %1183 = vmatmul.mubr.bf16.gmra.mrb[0].mxu0 %v1145
        %v1184 = vpop.f32.mrb[0].mxu0
        %v1185 = vadd.f32 0.0, %v1184
        %v1186 = vpop.f32.mrb[0].mxu0
        %v1187 = vpop.f32.mrb[0].mxu0
        %v1188 = vpop.f32.mrb[0].mxu0
        %1189 = vdwg.mxu0
        %v1191 = vsel %vm864, %v1095, 0
        %v1194 = vsel %vm1100, %v856, 0
        %1196 = vmatprep.subr.bf16.mxu0 0
        %1197 = vmatpush1.bf16.msra.mxu0 %v1194
        %1198 = vmatprep.subr.bf16.mxu0 0
        %1199 = vmatpush1.bf16.msra.mxu0 0
        %1200 = vmatprep.subr.bf16.mxu0 0
        %1201 = vmatpush1.bf16.msra.mxu0 0
        %1202 = vmatprep.subr.bf16.mxu0 0
        %1203 = vmatpush1.bf16.msra.mxu0 0
        %1204 = vmatprep.subr.bf16.mxu0 0
        %1205 = vmatpush1.bf16.msra.mxu0 0
        %1206 = vmatprep.subr.bf16.mxu0 0
        %1207 = vmatpush1.bf16.msra.mxu0 0
        %1208 = vmatprep.subr.bf16.mxu0 0
        %1209 = vmatpush1.bf16.msra.mxu0 0
        %1210 = vmatprep.subr.bf16.mxu0 0
        %1211 = vmatpush1.bf16.msra.mxu0 0
        %1212 = vmatprep.subr.bf16.mxu0 0
        %1213 = vmatpush1.bf16.msra.mxu0 0
        %1214 = vmatprep.subr.bf16.mxu0 0
        %1215 = vmatpush1.bf16.msra.mxu0 0
        %1216 = vmatprep.subr.bf16.mxu0 0
        %1217 = vmatpush1.bf16.msra.mxu0 0
        %1218 = vmatprep.subr.bf16.mxu0 0
        %1219 = vmatpush1.bf16.msra.mxu0 0
        %1220 = vmatprep.subr.bf16.mxu0 0
        %1221 = vmatpush1.bf16.msra.mxu0 0
        %1222 = vmatprep.subr.bf16.mxu0 0
        %1223 = vmatpush1.bf16.msra.mxu0 0
        %1224 = vmatprep.subr.bf16.mxu0 0
        %1225 = vmatpush1.bf16.msra.mxu0 0
        %1226 = vmatprep.subr.bf16.mxu0 0
        %1227 = vmatpush1.bf16.msra.mxu0 0
        %1228 = vmatprep.mubr.bf16.mxu0 0
        %1229 = vmatmul.mubr.bf16.gmra.mrb[0].mxu0 %v1191
        %v1230 = vpop.f32.mrb[0].mxu0
        %v1231 = vadd.f32 0.0, %v1230
        %v1232 = vpop.f32.mrb[0].mxu0
        %v1233 = vpop.f32.mrb[0].mxu0
        %v1234 = vpop.f32.mrb[0].mxu0
        %1235 = vdwg.mxu0
        %v1237 = vsel %vm864, %v1096, 0
        %v1240 = vsel %vm1100, %v857, 0
        %1242 = vmatprep.subr.bf16.mxu0 0
        %1243 = vmatpush1.bf16.msra.mxu0 %v1240
        %1244 = vmatprep.subr.bf16.mxu0 0
        %1245 = vmatpush1.bf16.msra.mxu0 0
        %1246 = vmatprep.subr.bf16.mxu0 0
        %1247 = vmatpush1.bf16.msra.mxu0 0
        %1248 = vmatprep.subr.bf16.mxu0 0
        %1249 = vmatpush1.bf16.msra.mxu0 0
        %1250 = vmatprep.subr.bf16.mxu0 0
        %1251 = vmatpush1.bf16.msra.mxu0 0
        %1252 = vmatprep.subr.bf16.mxu0 0
        %1253 = vmatpush1.bf16.msra.mxu0 0
        %1254 = vmatprep.subr.bf16.mxu0 0
        %1255 = vmatpush1.bf16.msra.mxu0 0
        %1256 = vmatprep.subr.bf16.mxu0 0
        %1257 = vmatpush1.bf16.msra.mxu0 0
        %1258 = vmatprep.subr.bf16.mxu0 0
        %1259 = vmatpush1.bf16.msra.mxu0 0
        %1260 = vmatprep.subr.bf16.mxu0 0
        %1261 = vmatpush1.bf16.msra.mxu0 0
        %1262 = vmatprep.subr.bf16.mxu0 0
        %1263 = vmatpush1.bf16.msra.mxu0 0
        %1264 = vmatprep.subr.bf16.mxu0 0
        %1265 = vmatpush1.bf16.msra.mxu0 0
        %1266 = vmatprep.subr.bf16.mxu0 0
        %1267 = vmatpush1.bf16.msra.mxu0 0
        %1268 = vmatprep.subr.bf16.mxu0 0
        %1269 = vmatpush1.bf16.msra.mxu0 0
        %1270 = vmatprep.subr.bf16.mxu0 0
        %1271 = vmatpush1.bf16.msra.mxu0 0
        %1272 = vmatprep.subr.bf16.mxu0 0
        %1273 = vmatpush1.bf16.msra.mxu0 0
        %1274 = vmatprep.mubr.bf16.mxu0 0
        %1275 = vmatmul.mubr.bf16.gmra.mrb[0].mxu0 %v1237
        %v1276 = vpop.f32.mrb[0].mxu0
        %v1277 = vadd.f32 0.0, %v1276
        %v1278 = vpop.f32.mrb[0].mxu0
        %v1279 = vpop.f32.mrb[0].mxu0
        %v1280 = vpop.f32.mrb[0].mxu0
        %1281 = vdwg.mxu0
        %v1282 = vcombine.low %v1139, %v1231
        %v1283 = vcombine.high %v1139, %v1231
        %v1285 = vunpack.c.l.s4 1983009808
        %v1286 = vunpack.c.0.s8 %v1285
        %v1287 = vlaneseq
        %v1288 = vshrl.u32 %v1287, 7
        %v1289 = vsub.s32 %v1286, %v1288
        %v1290 = vrot.slane %v1282, %v1289
        %v1292 = vunpack.c.l.s4 1983009808
        %v1293 = vunpack.c.0.s8 %v1292
        %v1294 = vlaneseq
        %v1295 = vshrl.u32 %v1294, 7
        %v1296 = vsub.s32 %v1293, %v1295
        %v1297 = vrot.slane %v1283, %v1296
        %v1298 = vcombine.low %v1185, %v1277
        %v1299 = vcombine.high %v1185, %v1277
        %v1301 = vunpack.c.l.s4 1983009808
        %v1302 = vunpack.c.0.s8 %v1301
        %v1303 = vlaneseq
        %v1304 = vshrl.u32 %v1303, 7
        %v1305 = vsub.s32 %v1302, %v1304
        %v1306 = vrot.slane %v1298, %v1305
        %v1308 = vunpack.c.l.s4 1983009808
        %v1309 = vunpack.c.0.s8 %v1308
        %v1310 = vlaneseq
        %v1311 = vshrl.u32 %v1310, 7
        %v1312 = vsub.s32 %v1309, %v1311
        %v1313 = vrot.slane %v1299, %v1312
        %v1314 = vcombine.low %v1290, %v1306
        %v1315 = vcombine.high %v1290, %v1306
        %v1317 = vunpack.c.l.s4 1934713408
        %v1318 = vunpack.c.0.s8 %v1317
        %v1319 = vlaneseq
        %v1320 = vshrl.u32 %v1319, 7
        %v1321 = vsub.s32 %v1318, %v1320
        %v1322 = vrot.slane %v1314, %v1321
        %v1324 = vunpack.c.l.s4 1934713408
        %v1325 = vunpack.c.0.s8 %v1324
        %v1326 = vlaneseq
        %v1327 = vshrl.u32 %v1326, 7
        %v1328 = vsub.s32 %v1325, %v1327
        %v1329 = vrot.slane %v1315, %v1328
        %v1330 = vcombine.low %v1297, %v1313
        %v1331 = vcombine.high %v1297, %v1313
        %v1333 = vunpack.c.l.s4 1934713408
        %v1334 = vunpack.c.0.s8 %v1333
        %v1335 = vlaneseq
        %v1336 = vshrl.u32 %v1335, 7
        %v1337 = vsub.s32 %v1334, %v1336
        %v1338 = vrot.slane %v1330, %v1337
        %v1340 = vunpack.c.l.s4 1934713408
        %v1341 = vunpack.c.0.s8 %v1340
        %v1342 = vlaneseq
        %v1343 = vshrl.u32 %v1342, 7
        %v1344 = vsub.s32 %v1341, %v1343
        %v1345 = vrot.slane %v1331, %v1344
        %v1346 = vcombine.high %v1322, 0.0
        %v1347 = vcombine.high %v1329, 0.0
        %v1348 = vcombine.high %v1338, 0.0
        %v1349 = vcombine.high %v1345, 0.0
        %v1350 = vcombine.low %v1322, %v1329
        %v1352 = vunpack.c.l.s4 1983009808
        %v1353 = vunpack.c.0.s8 %v1352
        %v1354 = vlaneseq
        %v1355 = vshrl.u32 %v1354, 7
        %v1356 = vsub.s32 %v1353, %v1355
        %v1357 = vrot.slane %v1350, %v1356
        %v1358 = vcombine.low %v1346, %v1347
        %v1360 = vunpack.c.l.s4 1983009808
        %v1361 = vunpack.c.0.s8 %v1360
        %v1362 = vlaneseq
        %v1363 = vshrl.u32 %v1362, 7
        %v1364 = vsub.s32 %v1361, %v1363
        %v1365 = vrot.slane %v1358, %v1364
        %v1366 = vcombine.low %v1338, %v1345
        %v1368 = vunpack.c.l.s4 1983009808
        %v1369 = vunpack.c.0.s8 %v1368
        %v1370 = vlaneseq
        %v1371 = vshrl.u32 %v1370, 7
        %v1372 = vsub.s32 %v1369, %v1371
        %v1373 = vrot.slane %v1366, %v1372
        %v1374 = vcombine.low %v1348, %v1349
        %v1376 = vunpack.c.l.s4 1983009808
        %v1377 = vunpack.c.0.s8 %v1376
        %v1378 = vlaneseq
        %v1379 = vshrl.u32 %v1378, 7
        %v1380 = vsub.s32 %v1377, %v1379
        %v1381 = vrot.slane %v1374, %v1380
        %v1382 = vcombine.low %v1357, %v1365
        %v1383 = vcombine.high %v1357, %v1365
        %v1385 = vunpack.c.l.s4 1934713408
        %v1386 = vunpack.c.0.s8 %v1385
        %v1387 = vlaneseq
        %v1388 = vshrl.u32 %v1387, 7
        %v1389 = vsub.s32 %v1386, %v1388
        %v1390 = vrot.slane %v1382, %v1389
        %v1392 = vunpack.c.l.s4 1934713408
        %v1393 = vunpack.c.0.s8 %v1392
        %v1394 = vlaneseq
        %v1395 = vshrl.u32 %v1394, 7
        %v1396 = vsub.s32 %v1393, %v1395
        %v1397 = vrot.slane %v1383, %v1396
        %v1398 = vcombine.low %v1373, %v1381
        %v1399 = vcombine.high %v1373, %v1381
        %v1401 = vunpack.c.l.s4 1934713408
        %v1402 = vunpack.c.0.s8 %v1401
        %v1403 = vlaneseq
        %v1404 = vshrl.u32 %v1403, 7
        %v1405 = vsub.s32 %v1402, %v1404
        %v1406 = vrot.slane %v1398, %v1405
        %v1408 = vunpack.c.l.s4 1934713408
        %v1409 = vunpack.c.0.s8 %v1408
        %v1410 = vlaneseq
        %v1411 = vshrl.u32 %v1410, 7
        %v1412 = vsub.s32 %v1409, %v1411
        %v1413 = vrot.slane %v1399, %v1412
        %v1414 = vcombine.low %v1390, %v1406
        %v1415 = vcombine.high %v1390, %v1406
        %v1416 = vcombine.low %v1397, %v1413
        %v1417 = vcombine.high %v1397, %v1413
        %1419 = vrot.lane.b32.xlu0 %v1415, 8
        %v1420 = vpop.permute.xlu0 %1419
        %1423 = vrot.lane.b32.xlu0 %v1416, 16
        %v1424 = vpop.permute.xlu0 %1423
        %1427 = vrot.lane.b32.xlu0 %v1417, 24
        %v1428 = vpop.permute.xlu0 %1427
        %v1430 = vsel %vm864, %v1414, %v1420
        %vm1431 = vcmask 130048
        %v1432 = vsel %vm1431, %v1430, %v1424
        %vm1433 = vcmask 195584
        %v1434 = vsel %vm1433, %v1432, %v1428
        %v1435 = vpack.c.bf16 %v1434, %v1434
        %v1436 = vld [vmem:[#allocation7] sm:$0xf]
        %v1437 = vld [vmem:[#allocation7 + $0x4] sm:$0xf]
        %v1438 = vld [vmem:[#allocation7 + $0x8] sm:$0xf]
        %v1439 = vld [vmem:[#allocation7 + $0xc] sm:$0xf]
        %v1440 = vld [vmem:[%s5] sm:$0x1]
        %v1442 = vlaneseq
        %v1443 = vshrl.u32 %v1442, 7
        %v1444 = vsub.s32 0, %v1443
        %v1445 = vrot.slane %v1440, %v1444
        %v1451 = vunpack.c.l.b16 %v1436
        %v1452 = vunpack.c.l.b16 %v1437
        %v1453 = vunpack.c.l.b16 %v1438
        %v1454 = vunpack.c.l.b16 %v1439
        %v1455 = vpack.c.b16 %v1452, %v1451
        %v1456 = vpack.c.b16 %v1454, %v1453
        %v1460 = vsel %vm300, %v1435, 0
        %1462 = vmatprep.subr.bf16.mxu0 0
        %1463 = vmatpush1.bf16.msra.mxu0 %v1455
        %1464 = vmatprep.subr.bf16.mxu0 0
        %1465 = vmatpush1.bf16.msra.mxu0 %v1456
        %1466 = vmatprep.subr.bf16.mxu0 0
        %1467 = vmatpush1.bf16.msra.mxu0 0
        %1468 = vmatprep.subr.bf16.mxu0 0
        %1469 = vmatpush1.bf16.msra.mxu0 0
        %1470 = vmatprep.subr.bf16.mxu0 0
        %1471 = vmatpush1.bf16.msra.mxu0 0
        %1472 = vmatprep.subr.bf16.mxu0 0
        %1473 = vmatpush1.bf16.msra.mxu0 0
        %1474 = vmatprep.subr.bf16.mxu0 0
        %1475 = vmatpush1.bf16.msra.mxu0 0
        %1476 = vmatprep.subr.bf16.mxu0 0
        %1477 = vmatpush1.bf16.msra.mxu0 0
        %1478 = vmatprep.subr.bf16.mxu0 0
        %1479 = vmatpush1.bf16.msra.mxu0 0
        %1480 = vmatprep.subr.bf16.mxu0 0
        %1481 = vmatpush1.bf16.msra.mxu0 0
        %1482 = vmatprep.subr.bf16.mxu0 0
        %1483 = vmatpush1.bf16.msra.mxu0 0
        %1484 = vmatprep.subr.bf16.mxu0 0
        %1485 = vmatpush1.bf16.msra.mxu0 0
        %1486 = vmatprep.subr.bf16.mxu0 0
        %1487 = vmatpush1.bf16.msra.mxu0 0
        %1488 = vmatprep.subr.bf16.mxu0 0
        %1489 = vmatpush1.bf16.msra.mxu0 0
        %1490 = vmatprep.subr.bf16.mxu0 0
        %1491 = vmatpush1.bf16.msra.mxu0 0
        %1492 = vmatprep.subr.bf16.mxu0 0
        %1493 = vmatpush1.bf16.msra.mxu0 0
        %1494 = vmatprep.mubr.bf16.mxu0 0
        %1495 = vmatmul.mubr.bf16.gmra.mrb[0].mxu0 %v1460
        %v1496 = vpop.f32.mrb[0].mxu0
        %v1497 = vadd.f32 %v1445, %v1496
        %v1498 = vpop.f32.mrb[0].mxu0
        %v1499 = vpop.f32.mrb[0].mxu0
        %v1500 = vpop.f32.mrb[0].mxu0
        %1501 = vdwg.mxu0
        %v1502 = vadd.f32 %v297, %v1497
        %1503 = vst.msk [vmem:[%s295] sm:$0xff] %vm300, %v1502
        %s1504 = sand.u32 %s163, 1
        %s1505 = scalar_lea.sflag [#allocation4], %s1504
        %s1506 = sand.u32 %s163, 1
        %s1507 = smul.addr %s1506, 8
        %s1508 = scalar_lea.vmem [#allocation8], %s1507
        // Predicated region
        $region57: #{tpu_custom_call.1} parent=43 // pred_check
          %p1509 = pneg %p173
        $region58: #{tpu_custom_call.1} parent=43 // pred_check_branch
          %1511 = sbr.rel (%p1509) target = $region60
        $region59: #{tpu_custom_call.1} parent=43 // pred_region
          %s1513 = ssub.s32 128, 128
          %1514 = vsyncadd %s1505, %s1513
          %s1515 = smul.addr %s24, 128
          %s1516 = scalar_lea.hbm %s6, %s1515
          %s1518 = sshll.u32 %s1508, 4
          %s1519 = int_to_ptr.vmem [resolvable:$true] %s1518
          %1521 = dma.vmem_to_hbm [thread:$0]  %s1519, 128, %s1516, %s1505
        $region60: #{tpu_custom_call.1} parent=43 // pred_fallthru
          _
      $region44: #{tpu_custom_call.1} parent=5 // pred_fallthru
        _
      %p1522 = scmp.le.s32.totalorder 2, %s19
      // Predicated region
      $region61: #{tpu_custom_call.1} parent=5 // pred_check
        %p1523 = pneg %p1522
      $region62: #{tpu_custom_call.1} parent=5 // pred_check_branch
        %1525 = sbr.rel (%p1523) target = $region64
      $region63: #{tpu_custom_call.1} parent=5 // pred_region
        %s1526 = ssub.s32 %s19, 2
        // Predicated region
        $region65: #{tpu_custom_call.1} parent=63 // pred_check
          %p1527 = pneg %p179
        $region66: #{tpu_custom_call.1} parent=63 // pred_check_branch
          %1529 = sbr.rel (%p1527) target = $region68
        $region67: #{tpu_custom_call.1} parent=63 // pred_region
          %s1530 = sand.u32 %s164, 1
          %s1531 = scalar_lea.sflag [#allocation4], %s1530
          %s1532 = sand.u32 %s164, 1
          %s1533 = smul.addr %s1532, 8
          %s1534 = scalar_lea.vmem [#allocation8], %s1533
          %1535 = dma.done %s1531, 128
        $region68: #{tpu_custom_call.1} parent=63 // pred_fallthru
          _
      $region64: #{tpu_custom_call.1} parent=5 // pred_fallthru
        _
    $region6: #{tpu_custom_call.1} parent=1 // loop_footer
      %s23 = sadd.s32 1, %s19
    $region7: #{tpu_custom_call.1} parent=1 // loop_footer_branch
      %18 = sbr.rel target = $region3
    $region8: #{tpu_custom_call.1} parent=1 // loop_exit
      _
    %1536 = vsyncpa [#allocation3], 1
    %s1537 = scalar_lea.sflag [#allocation3], 1
    %1538 = vsyncpa %s1537, 1
    %1539 = vsyncpa [#allocation6], 1
    %1540 = vsyncpa [#allocation4], 1
    %s1541 = scalar_lea.sflag [#allocation4], 1
    %1542 = vsyncpa %s1541, 1

</llo_original>
